<compile_context>
chip_gen: v5e
topology: v5e:2x2
jax: 0.10.0
libtpu: 0.0.40
codegen_flags: <defaults>
</compile_context>

<pallas_src>
import functools

import jax
import jax.numpy as jnp
from jax import lax
from jax.experimental import pallas as pl
from jax.experimental.pallas import tpu as pltpu


_VMEM_LIMIT = 32 * 1024 * 1024    # safe on v5e/v6e scoped VMEM and under v7x's 64 MiB
_M_TILE_CAP = 1024                # max output pixels (matmul M rows) per grid tile


def _choose_row_tile(ho, wo, cap=_M_TILE_CAP):
    """Largest divisor t of ho such that t*wo <= cap (falls back to 1)."""
    for t in range(ho, 0, -1):
        if ho % t == 0 and t * wo <= cap:
            return t
    return 1


def _space_to_depth2(x):
    """(N, H, W, C) -> (N, H//2, W//2, 4C); channel index = (p*2+q)*C + c."""
    n, h, w, c = x.shape
    x = x.reshape(n, h // 2, 2, w // 2, 2, c)
    x = jnp.transpose(x, (0, 1, 3, 2, 4, 5))
    return x.reshape(n, h // 2, w // 2, 4 * c)


# ---------------------------------------------------------------------------
# Pallas kernels
# ---------------------------------------------------------------------------
def _conv_mxu_kernel(x_ref, w_ref, b_ref, o_ref, *, taps_h, taps_w, t_ho, wo, act):
    """Fused im2col + matmul + bias + activation (MXU path).

    x_ref: (1, Hp, Wp, Cin)          bf16  full padded image of one batch element
    w_ref: (taps_h*taps_w, Cin, Cout) bf16  per-tap weight slabs
    b_ref: (1, Cout)                  f32
    o_ref: (1, t_ho, wo, Cout)
    """
    cin = x_ref.shape[3]
    cout = o_ref.shape[3]
    h0 = pl.program_id(1) * t_ho           # first output row of this tile
    m = t_ho * wo

    acc = None
    tap = 0
    for i in range(taps_h):                 # static, fully unrolled (4 or 16 taps)
        for j in range(taps_w):
            sub = x_ref[0, pl.ds(h0 + i, t_ho), pl.ds(j, wo), :]   # (t_ho, wo, cin)
            lhs = sub.reshape(m, cin)                               # patch tile
            part = jnp.dot(lhs, w_ref[tap], preferred_element_type=jnp.float32)
            acc = part if acc is None else acc + part
            tap += 1

    y = acc + b_ref[...]
    if act == "leaky_relu":
        y = jnp.where(y >= 0.0, y, 0.2 * y)
    elif act == "sigmoid":
        y = pl.reciprocal(1.0 + jnp.exp(-y), approx=True)
    o_ref[...] = y.reshape(1, t_ho, wo, cout).astype(o_ref.dtype)


def _conv_vpu_sigmoid_kernel(x_ref, w_ref, b_ref, o_ref, *, taps_h, taps_w, ho, wo):
    """Cout == 1 conv + sigmoid on the VPU/XLU (avoids a (K, 1) MXU matmul).

    x_ref: (1, Hp, Wp, Cin)  bf16
    w_ref: (taps_h*taps_w, Cin) f32
    b_ref: (1, 1)               f32
    o_ref: (1, ho, wo)          f32   (lane dim = wo, no Cout=1 masked stores)
    """
    acc = jnp.zeros((ho, wo), jnp.float32)
    tap = 0
    for i in range(taps_h):
        for j in range(taps_w):
            sub = x_ref[0, pl.ds(i, ho), pl.ds(j, wo), :].astype(jnp.float32)
            acc = acc + jnp.sum(sub * w_ref[tap], axis=-1)          # lane reduce (XLU)
            tap += 1
    z = acc + b_ref[...]
    y = pl.reciprocal(1.0 + jnp.exp(-z), approx=True)               # sigmoid via EUP
    o_ref[...] = y.reshape(o_ref.shape).astype(o_ref.dtype)


# ---------------------------------------------------------------------------
# Layer wrappers
# ---------------------------------------------------------------------------
def _conv_mxu(x_eff, w3d, b, *, taps, ho, wo, act, out_dtype):
    """x_eff: (N, ho+th-1, wo+tw-1, Cin) bf16; w3d: (th*tw, Cin, Cout) bf16."""
    n, hp, wp, cin = x_eff.shape
    cout = w3d.shape[2]
    th, tw = taps
    t_ho = _choose_row_tile(ho, wo)
    n_t = ho // t_ho

    kernel = functools.partial(_conv_mxu_kernel, taps_h=th, taps_w=tw,
                               t_ho=t_ho, wo=wo, act=act)
    m_total = n * ho * wo
    k_total = th * tw * cin
    cost = pl.CostEstimate(
        flops=2 * m_total * k_total * cout,
        transcendentals=m_total * cout if act == "sigmoid" else 0,
        bytes_accessed=(x_eff.size * 2 + w3d.size * 2 + 4 * cout
                        + m_total * cout * jnp.dtype(out_dtype).itemsize),
    )
    return pl.pallas_call(
        kernel,
        out_shape=jax.ShapeDtypeStruct((n, ho, wo, cout), out_dtype),
        grid=(n, n_t),
        in_specs=[
            # full padded image of one batch element, resident across the t axis
            pl.BlockSpec((1, hp, wp, cin), lambda i, t: (i, 0, 0, 0)),
            pl.BlockSpec((th * tw, cin, cout), lambda i, t: (0, 0, 0)),
            pl.BlockSpec((1, cout), lambda i, t: (0, 0)),
        ],
        out_specs=pl.BlockSpec((1, t_ho, wo, cout), lambda i, t: (i, t, 0, 0)),
        compiler_params=pltpu.CompilerParams(
            dimension_semantics=("parallel", "parallel"),
            vmem_limit_bytes=_VMEM_LIMIT,
        ),
        cost_estimate=cost,
    )(x_eff, w3d, b.reshape(1, cout).astype(jnp.float32))


def conv4x4_s2_lrelu(x_nhwc, w_oihw, b):
    """Conv2d(k=4, stride=2, pad=1) + LeakyReLU(0.2).  Requires even H, W."""
    n, h, w, cin = x_nhwc.shape
    cout = w_oihw.shape[0]
    assert h % 2 == 0 and w % 2 == 0, "stride-2 layer expects even H, W"
    ho, wo = h // 2, w // 2
    # stride-2 4x4 conv  ==  stride-1 2x2 conv over space-to-depth(2) input
    xp = jnp.pad(x_nhwc, ((0, 0), (1, 1), (1, 1), (0, 0)))
    xs = _space_to_depth2(xp).astype(jnp.bfloat16)            # (N, ho+1, wo+1, 4*cin)
    # (Cout, Cin, 4, 4) -> (tap = kh2*2+kw2, ch' = (p*2+q)*Cin + c, Cout)
    wt = jnp.transpose(w_oihw, (2, 3, 1, 0))                  # (kh, kw, cin, cout)
    w6 = wt.reshape(2, 2, 2, 2, cin, cout)                    # (kh2, p, kw2, q, c, co)
    w3d = jnp.transpose(w6, (0, 2, 1, 3, 4, 5)).reshape(4, 4 * cin, cout)
    w3d = w3d.astype(jnp.bfloat16)
    return _conv_mxu(xs, w3d, b, taps=(2, 2), ho=ho, wo=wo,
                     act="leaky_relu", out_dtype=jnp.bfloat16)


def conv4x4_s1_sigmoid(x_nhwc, w_oihw, b):
    """Conv2d(k=4, stride=1, pad=1, Cout=1) + Sigmoid via the VPU path."""
    n, h, w, cin = x_nhwc.shape
    assert w_oihw.shape[0] == 1
    ho, wo = h - 1, w - 1
    xp = jnp.pad(x_nhwc, ((0, 0), (1, 1), (1, 1), (0, 0))).astype(jnp.bfloat16)
    hp, wp = h + 2, w + 2
    w_taps = jnp.transpose(w_oihw, (2, 3, 1, 0)).reshape(16, cin).astype(jnp.float32)
    b2 = b.reshape(1, 1).astype(jnp.float32)

    kernel = functools.partial(_conv_vpu_sigmoid_kernel,
                               taps_h=4, taps_w=4, ho=ho, wo=wo)
    cost = pl.CostEstimate(
        flops=2 * n * ho * wo * 16 * cin,
        transcendentals=n * ho * wo,
        bytes_accessed=xp.size * 2 + w_taps.size * 4 + n * ho * wo * 4 + 4,
    )
    out = pl.pallas_call(
        kernel,
        out_shape=jax.ShapeDtypeStruct((n, ho, wo), jnp.float32),
        grid=(n,),
        in_specs=[
            pl.BlockSpec((1, hp, wp, cin), lambda i: (i, 0, 0, 0)),
            pl.BlockSpec((16, cin), lambda i: (0, 0)),
            pl.BlockSpec((1, 1), lambda i: (0, 0)),
        ],
        out_specs=pl.BlockSpec((1, ho, wo), lambda i: (i, 0, 0)),
        compiler_params=pltpu.CompilerParams(
            dimension_semantics=("parallel",),
            vmem_limit_bytes=_VMEM_LIMIT,
        ),
        cost_estimate=cost,
    )(xp, w_taps, b2)
    return out[:, None, :, :]                                 # (N, 1, Ho, Wo) NCHW


# ---------------------------------------------------------------------------
# Discriminator forward
# ---------------------------------------------------------------------------
def discriminator_forward(params, img_input, img_generated):
    (w1, b1), (w2, b2), (w3, b3) = params
    n = img_generated.shape[0]
    h, w = img_generated.shape[3], img_generated.shape[4]
    gen_flat = img_generated.reshape(n, -1, h, w)             # view(N, -1, H, W)
    x = jnp.concatenate([img_input, gen_flat], axis=1)        # (N, 18, H, W)
    # NCHW -> NHWC; XLA fuses this with layer-1's pad + space-to-depth relayout.
    x = jnp.transpose(x, (0, 2, 3, 1))

    x = conv4x4_s2_lrelu(x, w1, b1)                            # (N, H/2, W/2, 64)  bf16
    x = conv4x4_s2_lrelu(x, w2, b2)                            # (N, H/4, W/4, 128) bf16
    return conv4x4_s1_sigmoid(x, w3, b3)                       # (N, 1, H/4-1, W/4-1)


# ---------------------------------------------------------------------------
# Deterministic parameter init (matches PyTorch Conv2d default U(-1/sqrt(fan_in), +))
# ---------------------------------------------------------------------------
def init_params(key, in_channels=18):
    layer_defs = [(in_channels, 64, 4), (64, 128, 4), (128, 1, 4)]
    params = []
    for cin, cout, k in layer_defs:
        key, kw, kb = jax.random.split(key, 3)
        bound = 1.0 / float(jnp.sqrt(cin * k * k))
        w = jax.random.uniform(kw, (cout, cin, k, k), jnp.float32, -bound, bound)
        b = jax.random.uniform(kb, (cout,), jnp.float32, -bound, bound)
        params.append((w, b))
    return params


# ---------------------------------------------------------------------------
# Pure-JAX reference (full f32, HIGHEST precision) for a sanity check
# ---------------------------------------------------------------------------
def reference_forward(params, img_input, img_generated):
    n = img_generated.shape[0]
    h, w = img_generated.shape[3], img_generated.shape[4]
    gen_flat = img_generated.reshape(n, -1, h, w)
    x = jnp.concatenate([img_input, gen_flat], axis=1)
    x = jnp.transpose(x, (0, 2, 3, 1))  # NHWC
    strides = [2, 2, 1]
    acts = ["leaky_relu", "leaky_relu", "sigmoid"]
    for (wt, b), s, act in zip(params, strides, acts):
        w_hwio = jnp.transpose(wt, (2, 3, 1, 0))
        x = lax.conv_general_dilated(
            x, w_hwio, (s, s), [(1, 1), (1, 1)],
            dimension_numbers=("NHWC", "HWIO", "NHWC"),
            precision=lax.Precision.HIGHEST,
        ) + b
        if act == "leaky_relu":
            x = jnp.where(x >= 0.0, x, 0.2 * x)
        else:
            x = 1.0 / (1.0 + jnp.exp(-x))
    return jnp.transpose(x, (0, 3, 1, 2))


if __name__ == "__main__":
    key = jax.random.PRNGKey(0)
    k_params, k_in, k_gen = jax.random.split(key, 3)

    # img_input: (N=2, C=3, H=16, W=16); img_generated: (N=2, T=5, C=3, H=16, W=16)
    # concatenated channels: 3 + 5*3 = 18 == default in_channels
    img_input = jax.random.normal(k_in, (2, 3, 16, 16), jnp.float32)
    img_generated = jax.random.normal(k_gen, (2, 5, 3, 16, 16), jnp.float32)

    params = init_params(k_params, in_channels=18)

    out = jax.jit(discriminator_forward)(params, img_input, img_generated)
    out = jax.block_until_ready(out)

    assert out.shape == (2, 1, 3, 3), out.shape

    ref = reference_forward(params, img_input, img_generated)
    max_diff = float(jnp.max(jnp.abs(out - ref)))
    # bf16 MXU operands with f32 accumulation -> expect ~1e-3..1e-2 deviation
    assert max_diff < 3e-2, f"mismatch vs reference: {max_diff}"

    print("KERNEL_OK")
</pallas_src>

<mosaic_0001>
module attributes {stable_mosaic.version = 11 : i64} {
  func.func @_conv_mxu_kernel(%arg0: i32, %arg1: i32, %arg2: memref<1x9x9x72xbf16, #tpu.memory_space<vmem>>, %arg3: memref<4x72x64xbf16, #tpu.memory_space<vmem>>, %arg4: memref<1x64xf32, #tpu.memory_space<vmem>>, %arg5: memref<1x8x8x64xbf16, #tpu.memory_space<vmem>>) attributes {dimension_semantics = [#tpu.dimension_semantics<parallel>, #tpu.dimension_semantics<parallel>], iteration_bounds = array<i64: 2, 1>, scalar_prefetch = 0 : i64, scratch_operands = 0 : i64, tpu.core_type = #tpu.core_type<tc>, window_params = [{transform_indices = @transform_0, window_bounds = array<i64: 1, 9, 9, 72>}, {pipeline_mode = #tpu.pipeline_mode<synchronous>, transform_indices = @transform_1, window_bounds = array<i64: 4, 72, 64>}, {pipeline_mode = #tpu.pipeline_mode<synchronous>, transform_indices = @transform_2, window_bounds = array<i64: 1, 64>}, {transform_indices = @transform_3, window_bounds = array<i64: 1, 8, 8, 64>}]} {
    %c8_i32 = arith.constant 8 : i32
    %0 = arith.muli %arg1, %c8_i32 : i32
    %c0_i32 = arith.constant 0 : i32
    %1 = arith.addi %0, %c0_i32 : i32
    %c0 = arith.constant 0 : index
    %2 = arith.index_cast %1 : i32 to index
    %c0_0 = arith.constant 0 : index
    %c0_1 = arith.constant 0 : index
    %3 = vector.load %arg2[%c0, %2, %c0_0, %c0_1] : memref<1x9x9x72xbf16, #tpu.memory_space<vmem>>, vector<1x8x8x72xbf16>
    %4 = vector.shape_cast %3 : vector<1x8x8x72xbf16> to vector<8x8x72xbf16>
    %5 = vector.shape_cast %4 : vector<8x8x72xbf16> to vector<64x72xbf16>
    %c0_2 = arith.constant 0 : index
    %c0_3 = arith.constant 0 : index
    %c0_4 = arith.constant 0 : index
    %6 = vector.load %arg3[%c0_2, %c0_3, %c0_4] : memref<4x72x64xbf16, #tpu.memory_space<vmem>>, vector<1x72x64xbf16>
    %7 = vector.shape_cast %6 : vector<1x72x64xbf16> to vector<72x64xbf16>
    %cst = arith.constant dense<0.000000e+00> : vector<64x64xf32>
    %8 = tpu.matmul %5, %7, %cst {dimension_numbers = #tpu.dot_dimension_numbers<[1], [0], [0], [1], [0, 0, 1, 1], [], []>} : vector<64x72xbf16>, vector<72x64xbf16>, vector<64x64xf32> -> vector<64x64xf32>
    %c0_i32_5 = arith.constant 0 : i32
    %9 = arith.addi %0, %c0_i32_5 : i32
    %c0_6 = arith.constant 0 : index
    %10 = arith.index_cast %9 : i32 to index
    %c1 = arith.constant 1 : index
    %c0_7 = arith.constant 0 : index
    %11 = vector.load %arg2[%c0_6, %10, %c1, %c0_7] : memref<1x9x9x72xbf16, #tpu.memory_space<vmem>>, vector<1x8x8x72xbf16>
    %12 = vector.shape_cast %11 : vector<1x8x8x72xbf16> to vector<8x8x72xbf16>
    %13 = vector.shape_cast %12 : vector<8x8x72xbf16> to vector<64x72xbf16>
    %c1_8 = arith.constant 1 : index
    %c0_9 = arith.constant 0 : index
    %c0_10 = arith.constant 0 : index
    %14 = vector.load %arg3[%c1_8, %c0_9, %c0_10] : memref<4x72x64xbf16, #tpu.memory_space<vmem>>, vector<1x72x64xbf16>
    %15 = vector.shape_cast %14 : vector<1x72x64xbf16> to vector<72x64xbf16>
    %cst_11 = arith.constant dense<0.000000e+00> : vector<64x64xf32>
    %16 = tpu.matmul %13, %15, %cst_11 {dimension_numbers = #tpu.dot_dimension_numbers<[1], [0], [0], [1], [0, 0, 1, 1], [], []>} : vector<64x72xbf16>, vector<72x64xbf16>, vector<64x64xf32> -> vector<64x64xf32>
    %17 = arith.addf %8, %16 : vector<64x64xf32>
    %c1_i32 = arith.constant 1 : i32
    %18 = arith.addi %0, %c1_i32 : i32
    %c0_12 = arith.constant 0 : index
    %19 = arith.index_cast %18 : i32 to index
    %c0_13 = arith.constant 0 : index
    %c0_14 = arith.constant 0 : index
    %20 = vector.load %arg2[%c0_12, %19, %c0_13, %c0_14] : memref<1x9x9x72xbf16, #tpu.memory_space<vmem>>, vector<1x8x8x72xbf16>
    %21 = vector.shape_cast %20 : vector<1x8x8x72xbf16> to vector<8x8x72xbf16>
    %22 = vector.shape_cast %21 : vector<8x8x72xbf16> to vector<64x72xbf16>
    %c2 = arith.constant 2 : index
    %c0_15 = arith.constant 0 : index
    %c0_16 = arith.constant 0 : index
    %23 = vector.load %arg3[%c2, %c0_15, %c0_16] : memref<4x72x64xbf16, #tpu.memory_space<vmem>>, vector<1x72x64xbf16>
    %24 = vector.shape_cast %23 : vector<1x72x64xbf16> to vector<72x64xbf16>
    %cst_17 = arith.constant dense<0.000000e+00> : vector<64x64xf32>
    %25 = tpu.matmul %22, %24, %cst_17 {dimension_numbers = #tpu.dot_dimension_numbers<[1], [0], [0], [1], [0, 0, 1, 1], [], []>} : vector<64x72xbf16>, vector<72x64xbf16>, vector<64x64xf32> -> vector<64x64xf32>
    %26 = arith.addf %17, %25 : vector<64x64xf32>
    %c1_i32_18 = arith.constant 1 : i32
    %27 = arith.addi %0, %c1_i32_18 : i32
    %c0_19 = arith.constant 0 : index
    %28 = arith.index_cast %27 : i32 to index
    %c1_20 = arith.constant 1 : index
    %c0_21 = arith.constant 0 : index
    %29 = vector.load %arg2[%c0_19, %28, %c1_20, %c0_21] : memref<1x9x9x72xbf16, #tpu.memory_space<vmem>>, vector<1x8x8x72xbf16>
    %30 = vector.shape_cast %29 : vector<1x8x8x72xbf16> to vector<8x8x72xbf16>
    %31 = vector.shape_cast %30 : vector<8x8x72xbf16> to vector<64x72xbf16>
    %c3 = arith.constant 3 : index
    %c0_22 = arith.constant 0 : index
    %c0_23 = arith.constant 0 : index
    %32 = vector.load %arg3[%c3, %c0_22, %c0_23] : memref<4x72x64xbf16, #tpu.memory_space<vmem>>, vector<1x72x64xbf16>
    %33 = vector.shape_cast %32 : vector<1x72x64xbf16> to vector<72x64xbf16>
    %cst_24 = arith.constant dense<0.000000e+00> : vector<64x64xf32>
    %34 = tpu.matmul %31, %33, %cst_24 {dimension_numbers = #tpu.dot_dimension_numbers<[1], [0], [0], [1], [0, 0, 1, 1], [], []>} : vector<64x72xbf16>, vector<72x64xbf16>, vector<64x64xf32> -> vector<64x64xf32>
    %35 = arith.addf %26, %34 : vector<64x64xf32>
    %c0_25 = arith.constant 0 : index
    %c0_26 = arith.constant 0 : index
    %36 = vector.load %arg4[%c0_25, %c0_26] : memref<1x64xf32, #tpu.memory_space<vmem>>, vector<1x64xf32>
    %37 = vector.broadcast %36 : vector<1x64xf32> to vector<64x64xf32>
    %38 = arith.addf %35, %37 : vector<64x64xf32>
    %cst_27 = arith.constant 0.000000e+00 : f32
    %39 = vector.broadcast %cst_27 : f32 to vector<64x64xf32>
    %40 = arith.cmpf oge, %38, %39 : vector<64x64xf32>
    %cst_28 = arith.constant 2.000000e-01 : f32
    %41 = vector.broadcast %cst_28 : f32 to vector<64x64xf32>
    %42 = arith.mulf %41, %38 : vector<64x64xf32>
    %43 = arith.select %40, %38, %42 : vector<64x64xi1>, vector<64x64xf32>
    %44 = vector.shape_cast %43 : vector<64x64xf32> to vector<1x8x8x64xf32>
    %45 = arith.truncf %44 : vector<1x8x8x64xf32> to vector<1x8x8x64xbf16>
    %c0_29 = arith.constant 0 : index
    %c0_30 = arith.constant 0 : index
    %c0_31 = arith.constant 0 : index
    %c0_32 = arith.constant 0 : index
    %46 = vector.load %arg5[%c0_29, %c0_30, %c0_31, %c0_32] : memref<1x8x8x64xbf16, #tpu.memory_space<vmem>>, vector<1x8x8x64xbf16>
    tpu.vector_store %arg5[%c0_29, %c0_30, %c0_31, %c0_32], %45 {strides = array<i32>} : memref<1x8x8x64xbf16, #tpu.memory_space<vmem>>, vector<1x8x8x64xbf16>,
    return
  }
  func.func @transform_0(%arg0: i32, %arg1: i32) -> (i32, i32, i32, i32) {
    %c0_i32 = arith.constant 0 : i32
    %c0_i32_0 = arith.constant 0 : i32
    %c0_i32_1 = arith.constant 0 : i32
    %c0_i32_2 = arith.constant 0 : i32
    return %arg0, %c0_i32, %c0_i32_0, %c0_i32_1 : i32, i32, i32, i32
  }
  func.func @transform_1(%arg0: i32, %arg1: i32) -> (i32, i32, i32) {
    %c0_i32 = arith.constant 0 : i32
    %c0_i32_0 = arith.constant 0 : i32
    %c0_i32_1 = arith.constant 0 : i32
    %c0_i32_2 = arith.constant 0 : i32
    return %c0_i32, %c0_i32_0, %c0_i32_1 : i32, i32, i32
  }
  func.func @transform_2(%arg0: i32, %arg1: i32) -> (i32, i32) {
    %c0_i32 = arith.constant 0 : i32
    %c0_i32_0 = arith.constant 0 : i32
    %c0_i32_1 = arith.constant 0 : i32
    return %c0_i32, %c0_i32_0 : i32, i32
  }
  func.func @transform_3(%arg0: i32, %arg1: i32) -> (i32, i32, i32, i32) {
    %c0_i32 = arith.constant 0 : i32
    %c0_i32_0 = arith.constant 0 : i32
    %c0_i32_1 = arith.constant 0 : i32
    return %arg0, %arg1, %c0_i32, %c0_i32_0 : i32, i32, i32, i32
  }
}

module attributes {stable_mosaic.version = 11 : i64} {
  func.func @_conv_mxu_kernel(%arg0: i32, %arg1: i32, %arg2: memref<1x5x5x256xbf16, #tpu.memory_space<vmem>>, %arg3: memref<4x256x128xbf16, #tpu.memory_space<vmem>>, %arg4: memref<1x128xf32, #tpu.memory_space<vmem>>, %arg5: memref<1x4x4x128xbf16, #tpu.memory_space<vmem>>) attributes {dimension_semantics = [#tpu.dimension_semantics<parallel>, #tpu.dimension_semantics<parallel>], iteration_bounds = array<i64: 2, 1>, scalar_prefetch = 0 : i64, scratch_operands = 0 : i64, tpu.core_type = #tpu.core_type<tc>, window_params = [{transform_indices = @transform_0, window_bounds = array<i64: 1, 5, 5, 256>}, {pipeline_mode = #tpu.pipeline_mode<synchronous>, transform_indices = @transform_1, window_bounds = array<i64: 4, 256, 128>}, {pipeline_mode = #tpu.pipeline_mode<synchronous>, transform_indices = @transform_2, window_bounds = array<i64: 1, 128>}, {transform_indices = @transform_3, window_bounds = array<i64: 1, 4, 4, 128>}]} {
    %c4_i32 = arith.constant 4 : i32
    %0 = arith.muli %arg1, %c4_i32 : i32
    %c0_i32 = arith.constant 0 : i32
    %1 = arith.addi %0, %c0_i32 : i32
    %c0 = arith.constant 0 : index
    %2 = arith.index_cast %1 : i32 to index
    %c0_0 = arith.constant 0 : index
    %c0_1 = arith.constant 0 : index
    %3 = vector.load %arg2[%c0, %2, %c0_0, %c0_1] : memref<1x5x5x256xbf16, #tpu.memory_space<vmem>>, vector<1x4x4x256xbf16>
    %4 = vector.shape_cast %3 : vector<1x4x4x256xbf16> to vector<4x4x256xbf16>
    %5 = vector.shape_cast %4 : vector<4x4x256xbf16> to vector<16x256xbf16>
    %c0_2 = arith.constant 0 : index
    %c0_3 = arith.constant 0 : index
    %c0_4 = arith.constant 0 : index
    %6 = vector.load %arg3[%c0_2, %c0_3, %c0_4] : memref<4x256x128xbf16, #tpu.memory_space<vmem>>, vector<1x256x128xbf16>
    %7 = vector.shape_cast %6 : vector<1x256x128xbf16> to vector<256x128xbf16>
    %cst = arith.constant dense<0.000000e+00> : vector<16x128xf32>
    %8 = tpu.matmul %5, %7, %cst {dimension_numbers = #tpu.dot_dimension_numbers<[1], [0], [0], [1], [0, 0, 1, 1], [], []>} : vector<16x256xbf16>, vector<256x128xbf16>, vector<16x128xf32> -> vector<16x128xf32>
    %c0_i32_5 = arith.constant 0 : i32
    %9 = arith.addi %0, %c0_i32_5 : i32
    %c0_6 = arith.constant 0 : index
    %10 = arith.index_cast %9 : i32 to index
    %c1 = arith.constant 1 : index
    %c0_7 = arith.constant 0 : index
    %11 = vector.load %arg2[%c0_6, %10, %c1, %c0_7] : memref<1x5x5x256xbf16, #tpu.memory_space<vmem>>, vector<1x4x4x256xbf16>
    %12 = vector.shape_cast %11 : vector<1x4x4x256xbf16> to vector<4x4x256xbf16>
    %13 = vector.shape_cast %12 : vector<4x4x256xbf16> to vector<16x256xbf16>
    %c1_8 = arith.constant 1 : index
    %c0_9 = arith.constant 0 : index
    %c0_10 = arith.constant 0 : index
    %14 = vector.load %arg3[%c1_8, %c0_9, %c0_10] : memref<4x256x128xbf16, #tpu.memory_space<vmem>>, vector<1x256x128xbf16>
    %15 = vector.shape_cast %14 : vector<1x256x128xbf16> to vector<256x128xbf16>
    %cst_11 = arith.constant dense<0.000000e+00> : vector<16x128xf32>
    %16 = tpu.matmul %13, %15, %cst_11 {dimension_numbers = #tpu.dot_dimension_numbers<[1], [0], [0], [1], [0, 0, 1, 1], [], []>} : vector<16x256xbf16>, vector<256x128xbf16>, vector<16x128xf32> -> vector<16x128xf32>
    %17 = arith.addf %8, %16 : vector<16x128xf32>
    %c1_i32 = arith.constant 1 : i32
    %18 = arith.addi %0, %c1_i32 : i32
    %c0_12 = arith.constant 0 : index
    %19 = arith.index_cast %18 : i32 to index
    %c0_13 = arith.constant 0 : index
    %c0_14 = arith.constant 0 : index
    %20 = vector.load %arg2[%c0_12, %19, %c0_13, %c0_14] : memref<1x5x5x256xbf16, #tpu.memory_space<vmem>>, vector<1x4x4x256xbf16>
    %21 = vector.shape_cast %20 : vector<1x4x4x256xbf16> to vector<4x4x256xbf16>
    %22 = vector.shape_cast %21 : vector<4x4x256xbf16> to vector<16x256xbf16>
    %c2 = arith.constant 2 : index
    %c0_15 = arith.constant 0 : index
    %c0_16 = arith.constant 0 : index
    %23 = vector.load %arg3[%c2, %c0_15, %c0_16] : memref<4x256x128xbf16, #tpu.memory_space<vmem>>, vector<1x256x128xbf16>
    %24 = vector.shape_cast %23 : vector<1x256x128xbf16> to vector<256x128xbf16>
    %cst_17 = arith.constant dense<0.000000e+00> : vector<16x128xf32>
    %25 = tpu.matmul %22, %24, %cst_17 {dimension_numbers = #tpu.dot_dimension_numbers<[1], [0], [0], [1], [0, 0, 1, 1], [], []>} : vector<16x256xbf16>, vector<256x128xbf16>, vector<16x128xf32> -> vector<16x128xf32>
    %26 = arith.addf %17, %25 : vector<16x128xf32>
    %c1_i32_18 = arith.constant 1 : i32
    %27 = arith.addi %0, %c1_i32_18 : i32
    %c0_19 = arith.constant 0 : index
    %28 = arith.index_cast %27 : i32 to index
    %c1_20 = arith.constant 1 : index
    %c0_21 = arith.constant 0 : index
    %29 = vector.load %arg2[%c0_19, %28, %c1_20, %c0_21] : memref<1x5x5x256xbf16, #tpu.memory_space<vmem>>, vector<1x4x4x256xbf16>
    %30 = vector.shape_cast %29 : vector<1x4x4x256xbf16> to vector<4x4x256xbf16>
    %31 = vector.shape_cast %30 : vector<4x4x256xbf16> to vector<16x256xbf16>
    %c3 = arith.constant 3 : index
    %c0_22 = arith.constant 0 : index
    %c0_23 = arith.constant 0 : index
    %32 = vector.load %arg3[%c3, %c0_22, %c0_23] : memref<4x256x128xbf16, #tpu.memory_space<vmem>>, vector<1x256x128xbf16>
    %33 = vector.shape_cast %32 : vector<1x256x128xbf16> to vector<256x128xbf16>
    %cst_24 = arith.constant dense<0.000000e+00> : vector<16x128xf32>
    %34 = tpu.matmul %31, %33, %cst_24 {dimension_numbers = #tpu.dot_dimension_numbers<[1], [0], [0], [1], [0, 0, 1, 1], [], []>} : vector<16x256xbf16>, vector<256x128xbf16>, vector<16x128xf32> -> vector<16x128xf32>
    %35 = arith.addf %26, %34 : vector<16x128xf32>
    %c0_25 = arith.constant 0 : index
    %c0_26 = arith.constant 0 : index
    %36 = vector.load %arg4[%c0_25, %c0_26] : memref<1x128xf32, #tpu.memory_space<vmem>>, vector<1x128xf32>
    %37 = vector.broadcast %36 : vector<1x128xf32> to vector<16x128xf32>
    %38 = arith.addf %35, %37 : vector<16x128xf32>
    %cst_27 = arith.constant 0.000000e+00 : f32
    %39 = vector.broadcast %cst_27 : f32 to vector<16x128xf32>
    %40 = arith.cmpf oge, %38, %39 : vector<16x128xf32>
    %cst_28 = arith.constant 2.000000e-01 : f32
    %41 = vector.broadcast %cst_28 : f32 to vector<16x128xf32>
    %42 = arith.mulf %41, %38 : vector<16x128xf32>
    %43 = arith.select %40, %38, %42 : vector<16x128xi1>, vector<16x128xf32>
    %44 = vector.shape_cast %43 : vector<16x128xf32> to vector<1x4x4x128xf32>
    %45 = arith.truncf %44 : vector<1x4x4x128xf32> to vector<1x4x4x128xbf16>
    %c0_29 = arith.constant 0 : index
    %c0_30 = arith.constant 0 : index
    %c0_31 = arith.constant 0 : index
    %c0_32 = arith.constant 0 : index
    %46 = vector.load %arg5[%c0_29, %c0_30, %c0_31, %c0_32] : memref<1x4x4x128xbf16, #tpu.memory_space<vmem>>, vector<1x4x4x128xbf16>
    tpu.vector_store %arg5[%c0_29, %c0_30, %c0_31, %c0_32], %45 {strides = array<i32>} : memref<1x4x4x128xbf16, #tpu.memory_space<vmem>>, vector<1x4x4x128xbf16>,
    return
  }
  func.func @transform_0(%arg0: i32, %arg1: i32) -> (i32, i32, i32, i32) {
    %c0_i32 = arith.constant 0 : i32
    %c0_i32_0 = arith.constant 0 : i32
    %c0_i32_1 = arith.constant 0 : i32
    %c0_i32_2 = arith.constant 0 : i32
    return %arg0, %c0_i32, %c0_i32_0, %c0_i32_1 : i32, i32, i32, i32
  }
  func.func @transform_1(%arg0: i32, %arg1: i32) -> (i32, i32, i32) {
    %c0_i32 = arith.constant 0 : i32
    %c0_i32_0 = arith.constant 0 : i32
    %c0_i32_1 = arith.constant 0 : i32
    %c0_i32_2 = arith.constant 0 : i32
    return %c0_i32, %c0_i32_0, %c0_i32_1 : i32, i32, i32
  }
  func.func @transform_2(%arg0: i32, %arg1: i32) -> (i32, i32) {
    %c0_i32 = arith.constant 0 : i32
    %c0_i32_0 = arith.constant 0 : i32
    %c0_i32_1 = arith.constant 0 : i32
    return %c0_i32, %c0_i32_0 : i32, i32
  }
  func.func @transform_3(%arg0: i32, %arg1: i32) -> (i32, i32, i32, i32) {
    %c0_i32 = arith.constant 0 : i32
    %c0_i32_0 = arith.constant 0 : i32
    %c0_i32_1 = arith.constant 0 : i32
    return %arg0, %arg1, %c0_i32, %c0_i32_0 : i32, i32, i32, i32
  }
}

module attributes {stable_mosaic.version = 11 : i64} {
  func.func @_conv_vpu_sigmoid_kernel(%arg0: i32, %arg1: memref<1x6x6x128xbf16, #tpu.memory_space<vmem>>, %arg2: memref<16x128xf32, #tpu.memory_space<vmem>>, %arg3: memref<1x1xf32, #tpu.memory_space<vmem>>, %arg4: memref<1x3x3xf32, #tpu.memory_space<vmem>>) attributes {dimension_semantics = [#tpu.dimension_semantics<parallel>], iteration_bounds = array<i64: 2>, scalar_prefetch = 0 : i64, scratch_operands = 0 : i64, tpu.core_type = #tpu.core_type<tc>, window_params = [{transform_indices = @transform_0, window_bounds = array<i64: 1, 6, 6, 128>}, {pipeline_mode = #tpu.pipeline_mode<synchronous>, transform_indices = @transform_1, window_bounds = array<i64: 16, 128>}, {pipeline_mode = #tpu.pipeline_mode<synchronous>, transform_indices = @transform_2, window_bounds = array<i64: 1, 1>}, {transform_indices = @transform_3, window_bounds = array<i64: 1, 3, 3>}]} {
    %cst = arith.constant 0.000000e+00 : f32
    %0 = vector.broadcast %cst : f32 to vector<3x3xf32>
    %c0 = arith.constant 0 : index
    %c0_0 = arith.constant 0 : index
    %c0_1 = arith.constant 0 : index
    %c0_2 = arith.constant 0 : index
    %1 = vector.load %arg1[%c0, %c0_0, %c0_1, %c0_2] : memref<1x6x6x128xbf16, #tpu.memory_space<vmem>>, vector<1x3x3x128xbf16>
    %2 = vector.shape_cast %1 : vector<1x3x3x128xbf16> to vector<3x3x128xbf16>
    %3 = arith.extf %2 : vector<3x3x128xbf16> to vector<3x3x128xf32>
    %c0_3 = arith.constant 0 : index
    %c0_4 = arith.constant 0 : index
    %4 = vector.load %arg2[%c0_3, %c0_4] : memref<16x128xf32, #tpu.memory_space<vmem>>, vector<1x128xf32>
    %5 = vector.shape_cast %4 : vector<1x128xf32> to vector<128xf32>
    %6 = vector.shape_cast %5 : vector<128xf32> to vector<1x1x128xf32>
    %7 = vector.broadcast %6 : vector<1x1x128xf32> to vector<3x3x128xf32>
    %8 = arith.mulf %3, %7 : vector<3x3x128xf32>
    %cst_5 = arith.constant dense<0.000000e+00> : vector<3x3xf32>
    %9 = vector.multi_reduction <add>, %8, %cst_5 [2] : vector<3x3x128xf32> to vector<3x3xf32>
    %10 = arith.addf %0, %9 : vector<3x3xf32>
    %c0_6 = arith.constant 0 : index
    %c0_7 = arith.constant 0 : index
    %c1 = arith.constant 1 : index
    %c0_8 = arith.constant 0 : index
    %11 = vector.load %arg1[%c0_6, %c0_7, %c1, %c0_8] : memref<1x6x6x128xbf16, #tpu.memory_space<vmem>>, vector<1x3x3x128xbf16>
    %12 = vector.shape_cast %11 : vector<1x3x3x128xbf16> to vector<3x3x128xbf16>
    %13 = arith.extf %12 : vector<3x3x128xbf16> to vector<3x3x128xf32>
    %c1_9 = arith.constant 1 : index
    %c0_10 = arith.constant 0 : index
    %14 = vector.load %arg2[%c1_9, %c0_10] : memref<16x128xf32, #tpu.memory_space<vmem>>, vector<1x128xf32>
    %15 = vector.shape_cast %14 : vector<1x128xf32> to vector<128xf32>
    %16 = vector.shape_cast %15 : vector<128xf32> to vector<1x1x128xf32>
    %17 = vector.broadcast %16 : vector<1x1x128xf32> to vector<3x3x128xf32>
    %18 = arith.mulf %13, %17 : vector<3x3x128xf32>
    %cst_11 = arith.constant dense<0.000000e+00> : vector<3x3xf32>
    %19 = vector.multi_reduction <add>, %18, %cst_11 [2] : vector<3x3x128xf32> to vector<3x3xf32>
    %20 = arith.addf %10, %19 : vector<3x3xf32>
    %c0_12 = arith.constant 0 : index
    %c0_13 = arith.constant 0 : index
    %c2 = arith.constant 2 : index
    %c0_14 = arith.constant 0 : index
    %21 = vector.load %arg1[%c0_12, %c0_13, %c2, %c0_14] : memref<1x6x6x128xbf16, #tpu.memory_space<vmem>>, vector<1x3x3x128xbf16>
    %22 = vector.shape_cast %21 : vector<1x3x3x128xbf16> to vector<3x3x128xbf16>
    %23 = arith.extf %22 : vector<3x3x128xbf16> to vector<3x3x128xf32>
    %c2_15 = arith.constant 2 : index
    %c0_16 = arith.constant 0 : index
    %24 = vector.load %arg2[%c2_15, %c0_16] : memref<16x128xf32, #tpu.memory_space<vmem>>, vector<1x128xf32>
    %25 = vector.shape_cast %24 : vector<1x128xf32> to vector<128xf32>
    %26 = vector.shape_cast %25 : vector<128xf32> to vector<1x1x128xf32>
    %27 = vector.broadcast %26 : vector<1x1x128xf32> to vector<3x3x128xf32>
    %28 = arith.mulf %23, %27 : vector<3x3x128xf32>
    %cst_17 = arith.constant dense<0.000000e+00> : vector<3x3xf32>
    %29 = vector.multi_reduction <add>, %28, %cst_17 [2] : vector<3x3x128xf32> to vector<3x3xf32>
    %30 = arith.addf %20, %29 : vector<3x3xf32>
    %c0_18 = arith.constant 0 : index
    %c0_19 = arith.constant 0 : index
    %c3 = arith.constant 3 : index
    %c0_20 = arith.constant 0 : index
    %31 = vector.load %arg1[%c0_18, %c0_19, %c3, %c0_20] : memref<1x6x6x128xbf16, #tpu.memory_space<vmem>>, vector<1x3x3x128xbf16>
    %32 = vector.shape_cast %31 : vector<1x3x3x128xbf16> to vector<3x3x128xbf16>
    %33 = arith.extf %32 : vector<3x3x128xbf16> to vector<3x3x128xf32>
    %c3_21 = arith.constant 3 : index
    %c0_22 = arith.constant 0 : index
    %34 = vector.load %arg2[%c3_21, %c0_22] : memref<16x128xf32, #tpu.memory_space<vmem>>, vector<1x128xf32>
    %35 = vector.shape_cast %34 : vector<1x128xf32> to vector<128xf32>
    %36 = vector.shape_cast %35 : vector<128xf32> to vector<1x1x128xf32>
    %37 = vector.broadcast %36 : vector<1x1x128xf32> to vector<3x3x128xf32>
    %38 = arith.mulf %33, %37 : vector<3x3x128xf32>
    %cst_23 = arith.constant dense<0.000000e+00> : vector<3x3xf32>
    %39 = vector.multi_reduction <add>, %38, %cst_23 [2] : vector<3x3x128xf32> to vector<3x3xf32>
    %40 = arith.addf %30, %39 : vector<3x3xf32>
    %c0_24 = arith.constant 0 : index
    %c1_25 = arith.constant 1 : index
    %c0_26 = arith.constant 0 : index
    %c0_27 = arith.constant 0 : index
    %41 = vector.load %arg1[%c0_24, %c1_25, %c0_26, %c0_27] : memref<1x6x6x128xbf16, #tpu.memory_space<vmem>>, vector<1x3x3x128xbf16>
    %42 = vector.shape_cast %41 : vector<1x3x3x128xbf16> to vector<3x3x128xbf16>
    %43 = arith.extf %42 : vector<3x3x128xbf16> to vector<3x3x128xf32>
    %c4 = arith.constant 4 : index
    %c0_28 = arith.constant 0 : index
    %44 = vector.load %arg2[%c4, %c0_28] : memref<16x128xf32, #tpu.memory_space<vmem>>, vector<1x128xf32>
    %45 = vector.shape_cast %44 : vector<1x128xf32> to vector<128xf32>
    %46 = vector.shape_cast %45 : vector<128xf32> to vector<1x1x128xf32>
    %47 = vector.broadcast %46 : vector<1x1x128xf32> to vector<3x3x128xf32>
    %48 = arith.mulf %43, %47 : vector<3x3x128xf32>
    %cst_29 = arith.constant dense<0.000000e+00> : vector<3x3xf32>
    %49 = vector.multi_reduction <add>, %48, %cst_29 [2] : vector<3x3x128xf32> to vector<3x3xf32>
    %50 = arith.addf %40, %49 : vector<3x3xf32>
    %c0_30 = arith.constant 0 : index
    %c1_31 = arith.constant 1 : index
    %c1_32 = arith.constant 1 : index
    %c0_33 = arith.constant 0 : index
    %51 = vector.load %arg1[%c0_30, %c1_31, %c1_32, %c0_33] : memref<1x6x6x128xbf16, #tpu.memory_space<vmem>>, vector<1x3x3x128xbf16>
    %52 = vector.shape_cast %51 : vector<1x3x3x128xbf16> to vector<3x3x128xbf16>
    %53 = arith.extf %52 : vector<3x3x128xbf16> to vector<3x3x128xf32>
    %c5 = arith.constant 5 : index
    %c0_34 = arith.constant 0 : index
    %54 = vector.load %arg2[%c5, %c0_34] : memref<16x128xf32, #tpu.memory_space<vmem>>, vector<1x128xf32>
    %55 = vector.shape_cast %54 : vector<1x128xf32> to vector<128xf32>
    %56 = vector.shape_cast %55 : vector<128xf32> to vector<1x1x128xf32>
    %57 = vector.broadcast %56 : vector<1x1x128xf32> to vector<3x3x128xf32>
    %58 = arith.mulf %53, %57 : vector<3x3x128xf32>
    %cst_35 = arith.constant dense<0.000000e+00> : vector<3x3xf32>
    %59 = vector.multi_reduction <add>, %58, %cst_35 [2] : vector<3x3x128xf32> to vector<3x3xf32>
    %60 = arith.addf %50, %59 : vector<3x3xf32>
    %c0_36 = arith.constant 0 : index
    %c1_37 = arith.constant 1 : index
    %c2_38 = arith.constant 2 : index
    %c0_39 = arith.constant 0 : index
    %61 = vector.load %arg1[%c0_36, %c1_37, %c2_38, %c0_39] : memref<1x6x6x128xbf16, #tpu.memory_space<vmem>>, vector<1x3x3x128xbf16>
    %62 = vector.shape_cast %61 : vector<1x3x3x128xbf16> to vector<3x3x128xbf16>
    %63 = arith.extf %62 : vector<3x3x128xbf16> to vector<3x3x128xf32>
    %c6 = arith.constant 6 : index
    %c0_40 = arith.constant 0 : index
    %64 = vector.load %arg2[%c6, %c0_40] : memref<16x128xf32, #tpu.memory_space<vmem>>, vector<1x128xf32>
    %65 = vector.shape_cast %64 : vector<1x128xf32> to vector<128xf32>
    %66 = vector.shape_cast %65 : vector<128xf32> to vector<1x1x128xf32>
    %67 = vector.broadcast %66 : vector<1x1x128xf32> to vector<3x3x128xf32>
    %68 = arith.mulf %63, %67 : vector<3x3x128xf32>
    %cst_41 = arith.constant dense<0.000000e+00> : vector<3x3xf32>
    %69 = vector.multi_reduction <add>, %68, %cst_41 [2] : vector<3x3x128xf32> to vector<3x3xf32>
    %70 = arith.addf %60, %69 : vector<3x3xf32>
    %c0_42 = arith.constant 0 : index
    %c1_43 = arith.constant 1 : index
    %c3_44 = arith.constant 3 : index
    %c0_45 = arith.constant 0 : index
    %71 = vector.load %arg1[%c0_42, %c1_43, %c3_44, %c0_45] : memref<1x6x6x128xbf16, #tpu.memory_space<vmem>>, vector<1x3x3x128xbf16>
    %72 = vector.shape_cast %71 : vector<1x3x3x128xbf16> to vector<3x3x128xbf16>
    %73 = arith.extf %72 : vector<3x3x128xbf16> to vector<3x3x128xf32>
    %c7 = arith.constant 7 : index
    %c0_46 = arith.constant 0 : index
    %74 = vector.load %arg2[%c7, %c0_46] : memref<16x128xf32, #tpu.memory_space<vmem>>, vector<1x128xf32>
    %75 = vector.shape_cast %74 : vector<1x128xf32> to vector<128xf32>
    %76 = vector.shape_cast %75 : vector<128xf32> to vector<1x1x128xf32>
    %77 = vector.broadcast %76 : vector<1x1x128xf32> to vector<3x3x128xf32>
    %78 = arith.mulf %73, %77 : vector<3x3x128xf32>
    %cst_47 = arith.constant dense<0.000000e+00> : vector<3x3xf32>
    %79 = vector.multi_reduction <add>, %78, %cst_47 [2] : vector<3x3x128xf32> to vector<3x3xf32>
    %80 = arith.addf %70, %79 : vector<3x3xf32>
    %c0_48 = arith.constant 0 : index
    %c2_49 = arith.constant 2 : index
    %c0_50 = arith.constant 0 : index
    %c0_51 = arith.constant 0 : index
    %81 = vector.load %arg1[%c0_48, %c2_49, %c0_50, %c0_51] : memref<1x6x6x128xbf16, #tpu.memory_space<vmem>>, vector<1x3x3x128xbf16>
    %82 = vector.shape_cast %81 : vector<1x3x3x128xbf16> to vector<3x3x128xbf16>
    %83 = arith.extf %82 : vector<3x3x128xbf16> to vector<3x3x128xf32>
    %c8 = arith.constant 8 : index
    %c0_52 = arith.constant 0 : index
    %84 = vector.load %arg2[%c8, %c0_52] : memref<16x128xf32, #tpu.memory_space<vmem>>, vector<1x128xf32>
    %85 = vector.shape_cast %84 : vector<1x128xf32> to vector<128xf32>
    %86 = vector.shape_cast %85 : vector<128xf32> to vector<1x1x128xf32>
    %87 = vector.broadcast %86 : vector<1x1x128xf32> to vector<3x3x128xf32>
    %88 = arith.mulf %83, %87 : vector<3x3x128xf32>
    %cst_53 = arith.constant dense<0.000000e+00> : vector<3x3xf32>
    %89 = vector.multi_reduction <add>, %88, %cst_53 [2] : vector<3x3x128xf32> to vector<3x3xf32>
    %90 = arith.addf %80, %89 : vector<3x3xf32>
    %c0_54 = arith.constant 0 : index
    %c2_55 = arith.constant 2 : index
    %c1_56 = arith.constant 1 : index
    %c0_57 = arith.constant 0 : index
    %91 = vector.load %arg1[%c0_54, %c2_55, %c1_56, %c0_57] : memref<1x6x6x128xbf16, #tpu.memory_space<vmem>>, vector<1x3x3x128xbf16>
    %92 = vector.shape_cast %91 : vector<1x3x3x128xbf16> to vector<3x3x128xbf16>
    %93 = arith.extf %92 : vector<3x3x128xbf16> to vector<3x3x128xf32>
    %c9 = arith.constant 9 : index
    %c0_58 = arith.constant 0 : index
    %94 = vector.load %arg2[%c9, %c0_58] : memref<16x128xf32, #tpu.memory_space<vmem>>, vector<1x128xf32>
    %95 = vector.shape_cast %94 : vector<1x128xf32> to vector<128xf32>
    %96 = vector.shape_cast %95 : vector<128xf32> to vector<1x1x128xf32>
    %97 = vector.broadcast %96 : vector<1x1x128xf32> to vector<3x3x128xf32>
    %98 = arith.mulf %93, %97 : vector<3x3x128xf32>
    %cst_59 = arith.constant dense<0.000000e+00> : vector<3x3xf32>
    %99 = vector.multi_reduction <add>, %98, %cst_59 [2] : vector<3x3x128xf32> to vector<3x3xf32>
    %100 = arith.addf %90, %99 : vector<3x3xf32>
    %c0_60 = arith.constant 0 : index
    %c2_61 = arith.constant 2 : index
    %c2_62 = arith.constant 2 : index
    %c0_63 = arith.constant 0 : index
    %101 = vector.load %arg1[%c0_60, %c2_61, %c2_62, %c0_63] : memref<1x6x6x128xbf16, #tpu.memory_space<vmem>>, vector<1x3x3x128xbf16>
    %102 = vector.shape_cast %101 : vector<1x3x3x128xbf16> to vector<3x3x128xbf16>
    %103 = arith.extf %102 : vector<3x3x128xbf16> to vector<3x3x128xf32>
    %c10 = arith.constant 10 : index
    %c0_64 = arith.constant 0 : index
    %104 = vector.load %arg2[%c10, %c0_64] : memref<16x128xf32, #tpu.memory_space<vmem>>, vector<1x128xf32>
    %105 = vector.shape_cast %104 : vector<1x128xf32> to vector<128xf32>
    %106 = vector.shape_cast %105 : vector<128xf32> to vector<1x1x128xf32>
    %107 = vector.broadcast %106 : vector<1x1x128xf32> to vector<3x3x128xf32>
    %108 = arith.mulf %103, %107 : vector<3x3x128xf32>
    %cst_65 = arith.constant dense<0.000000e+00> : vector<3x3xf32>
    %109 = vector.multi_reduction <add>, %108, %cst_65 [2] : vector<3x3x128xf32> to vector<3x3xf32>
    %110 = arith.addf %100, %109 : vector<3x3xf32>
    %c0_66 = arith.constant 0 : index
    %c2_67 = arith.constant 2 : index
    %c3_68 = arith.constant 3 : index
    %c0_69 = arith.constant 0 : index
    %111 = vector.load %arg1[%c0_66, %c2_67, %c3_68, %c0_69] : memref<1x6x6x128xbf16, #tpu.memory_space<vmem>>, vector<1x3x3x128xbf16>
    %112 = vector.shape_cast %111 : vector<1x3x3x128xbf16> to vector<3x3x128xbf16>
    %113 = arith.extf %112 : vector<3x3x128xbf16> to vector<3x3x128xf32>
    %c11 = arith.constant 11 : index
    %c0_70 = arith.constant 0 : index
    %114 = vector.load %arg2[%c11, %c0_70] : memref<16x128xf32, #tpu.memory_space<vmem>>, vector<1x128xf32>
    %115 = vector.shape_cast %114 : vector<1x128xf32> to vector<128xf32>
    %116 = vector.shape_cast %115 : vector<128xf32> to vector<1x1x128xf32>
    %117 = vector.broadcast %116 : vector<1x1x128xf32> to vector<3x3x128xf32>
    %118 = arith.mulf %113, %117 : vector<3x3x128xf32>
    %cst_71 = arith.constant dense<0.000000e+00> : vector<3x3xf32>
    %119 = vector.multi_reduction <add>, %118, %cst_71 [2] : vector<3x3x128xf32> to vector<3x3xf32>
    %120 = arith.addf %110, %119 : vector<3x3xf32>
    %c0_72 = arith.constant 0 : index
    %c3_73 = arith.constant 3 : index
    %c0_74 = arith.constant 0 : index
    %c0_75 = arith.constant 0 : index
    %121 = vector.load %arg1[%c0_72, %c3_73, %c0_74, %c0_75] : memref<1x6x6x128xbf16, #tpu.memory_space<vmem>>, vector<1x3x3x128xbf16>
    %122 = vector.shape_cast %121 : vector<1x3x3x128xbf16> to vector<3x3x128xbf16>
    %123 = arith.extf %122 : vector<3x3x128xbf16> to vector<3x3x128xf32>
    %c12 = arith.constant 12 : index
    %c0_76 = arith.constant 0 : index
    %124 = vector.load %arg2[%c12, %c0_76] : memref<16x128xf32, #tpu.memory_space<vmem>>, vector<1x128xf32>
    %125 = vector.shape_cast %124 : vector<1x128xf32> to vector<128xf32>
    %126 = vector.shape_cast %125 : vector<128xf32> to vector<1x1x128xf32>
    %127 = vector.broadcast %126 : vector<1x1x128xf32> to vector<3x3x128xf32>
    %128 = arith.mulf %123, %127 : vector<3x3x128xf32>
    %cst_77 = arith.constant dense<0.000000e+00> : vector<3x3xf32>
    %129 = vector.multi_reduction <add>, %128, %cst_77 [2] : vector<3x3x128xf32> to vector<3x3xf32>
    %130 = arith.addf %120, %129 : vector<3x3xf32>
    %c0_78 = arith.constant 0 : index
    %c3_79 = arith.constant 3 : index
    %c1_80 = arith.constant 1 : index
    %c0_81 = arith.constant 0 : index
    %131 = vector.load %arg1[%c0_78, %c3_79, %c1_80, %c0_81] : memref<1x6x6x128xbf16, #tpu.memory_space<vmem>>, vector<1x3x3x128xbf16>
    %132 = vector.shape_cast %131 : vector<1x3x3x128xbf16> to vector<3x3x128xbf16>
    %133 = arith.extf %132 : vector<3x3x128xbf16> to vector<3x3x128xf32>
    %c13 = arith.constant 13 : index
    %c0_82 = arith.constant 0 : index
    %134 = vector.load %arg2[%c13, %c0_82] : memref<16x128xf32, #tpu.memory_space<vmem>>, vector<1x128xf32>
    %135 = vector.shape_cast %134 : vector<1x128xf32> to vector<128xf32>
    %136 = vector.shape_cast %135 : vector<128xf32> to vector<1x1x128xf32>
    %137 = vector.broadcast %136 : vector<1x1x128xf32> to vector<3x3x128xf32>
    %138 = arith.mulf %133, %137 : vector<3x3x128xf32>
    %cst_83 = arith.constant dense<0.000000e+00> : vector<3x3xf32>
    %139 = vector.multi_reduction <add>, %138, %cst_83 [2] : vector<3x3x128xf32> to vector<3x3xf32>
    %140 = arith.addf %130, %139 : vector<3x3xf32>
    %c0_84 = arith.constant 0 : index
    %c3_85 = arith.constant 3 : index
    %c2_86 = arith.constant 2 : index
    %c0_87 = arith.constant 0 : index
    %141 = vector.load %arg1[%c0_84, %c3_85, %c2_86, %c0_87] : memref<1x6x6x128xbf16, #tpu.memory_space<vmem>>, vector<1x3x3x128xbf16>
    %142 = vector.shape_cast %141 : vector<1x3x3x128xbf16> to vector<3x3x128xbf16>
    %143 = arith.extf %142 : vector<3x3x128xbf16> to vector<3x3x128xf32>
    %c14 = arith.constant 14 : index
    %c0_88 = arith.constant 0 : index
    %144 = vector.load %arg2[%c14, %c0_88] : memref<16x128xf32, #tpu.memory_space<vmem>>, vector<1x128xf32>
    %145 = vector.shape_cast %144 : vector<1x128xf32> to vector<128xf32>
    %146 = vector.shape_cast %145 : vector<128xf32> to vector<1x1x128xf32>
    %147 = vector.broadcast %146 : vector<1x1x128xf32> to vector<3x3x128xf32>
    %148 = arith.mulf %143, %147 : vector<3x3x128xf32>
    %cst_89 = arith.constant dense<0.000000e+00> : vector<3x3xf32>
    %149 = vector.multi_reduction <add>, %148, %cst_89 [2] : vector<3x3x128xf32> to vector<3x3xf32>
    %150 = arith.addf %140, %149 : vector<3x3xf32>
    %c0_90 = arith.constant 0 : index
    %c3_91 = arith.constant 3 : index
    %c3_92 = arith.constant 3 : index
    %c0_93 = arith.constant 0 : index
    %151 = vector.load %arg1[%c0_90, %c3_91, %c3_92, %c0_93] : memref<1x6x6x128xbf16, #tpu.memory_space<vmem>>, vector<1x3x3x128xbf16>
    %152 = vector.shape_cast %151 : vector<1x3x3x128xbf16> to vector<3x3x128xbf16>
    %153 = arith.extf %152 : vector<3x3x128xbf16> to vector<3x3x128xf32>
    %c15 = arith.constant 15 : index
    %c0_94 = arith.constant 0 : index
    %154 = vector.load %arg2[%c15, %c0_94] : memref<16x128xf32, #tpu.memory_space<vmem>>, vector<1x128xf32>
    %155 = vector.shape_cast %154 : vector<1x128xf32> to vector<128xf32>
    %156 = vector.shape_cast %155 : vector<128xf32> to vector<1x1x128xf32>
    %157 = vector.broadcast %156 : vector<1x1x128xf32> to vector<3x3x128xf32>
    %158 = arith.mulf %153, %157 : vector<3x3x128xf32>
    %cst_95 = arith.constant dense<0.000000e+00> : vector<3x3xf32>
    %159 = vector.multi_reduction <add>, %158, %cst_95 [2] : vector<3x3x128xf32> to vector<3x3xf32>
    %160 = arith.addf %150, %159 : vector<3x3xf32>
    %c0_96 = arith.constant 0 : index
    %c0_97 = arith.constant 0 : index
    %161 = vector.load %arg3[%c0_96, %c0_97] : memref<1x1xf32, #tpu.memory_space<vmem>>, vector<1x1xf32>
    %162 = vector.broadcast %161 : vector<1x1xf32> to vector<3x3xf32>
    %163 = arith.addf %160, %162 : vector<3x3xf32>
    %cst_98 = arith.constant 0.000000e+00 : f32
    %164 = vector.broadcast %cst_98 : f32 to vector<3x3xf32>
    %165 = arith.subf %164, %163 : vector<3x3xf32>
    %166 = math.exp %165 : vector<3x3xf32>
    %cst_99 = arith.constant 1.000000e+00 : f32
    %167 = vector.broadcast %cst_99 : f32 to vector<3x3xf32>
    %168 = arith.addf %167, %166 : vector<3x3xf32>
    %169 = tpu.reciprocal %168 {approx = true} : vector<3x3xf32> -> vector<3x3xf32>
    %170 = vector.shape_cast %169 : vector<3x3xf32> to vector<1x3x3xf32>
    %c0_100 = arith.constant 0 : index
    %c0_101 = arith.constant 0 : index
    %c0_102 = arith.constant 0 : index
    %171 = vector.load %arg4[%c0_100, %c0_101, %c0_102] : memref<1x3x3xf32, #tpu.memory_space<vmem>>, vector<1x3x3xf32>
    tpu.vector_store %arg4[%c0_100, %c0_101, %c0_102], %170 {strides = array<i32>} : memref<1x3x3xf32, #tpu.memory_space<vmem>>, vector<1x3x3xf32>,
    return
  }
  func.func @transform_0(%arg0: i32) -> (i32, i32, i32, i32) {
    %c0_i32 = arith.constant 0 : i32
    %c0_i32_0 = arith.constant 0 : i32
    %c0_i32_1 = arith.constant 0 : i32
    %c0_i32_2 = arith.constant 0 : i32
    return %arg0, %c0_i32, %c0_i32_0, %c0_i32_1 : i32, i32, i32, i32
  }
  func.func @transform_1(%arg0: i32) -> (i32, i32) {
    %c0_i32 = arith.constant 0 : i32
    %c0_i32_0 = arith.constant 0 : i32
    %c0_i32_1 = arith.constant 0 : i32
    return %c0_i32, %c0_i32_0 : i32, i32
  }
  func.func @transform_2(%arg0: i32) -> (i32, i32) {
    %c0_i32 = arith.constant 0 : i32
    %c0_i32_0 = arith.constant 0 : i32
    %c0_i32_1 = arith.constant 0 : i32
    return %c0_i32, %c0_i32_0 : i32, i32
  }
  func.func @transform_3(%arg0: i32) -> (i32, i32, i32) {
    %c0_i32 = arith.constant 0 : i32
    %c0_i32_0 = arith.constant 0 : i32
    %c0_i32_1 = arith.constant 0 : i32
    return %arg0, %c0_i32, %c0_i32_0 : i32, i32, i32
  }
}

</mosaic_0001>

<llo_original>
// kernel: discriminator_forward.3
$region0: #{discriminator_forward.3}
  #allocation0 [shape = 'u32[]', space=smem, size = 0x4, offset = 0x4, fixed_abs, tag = 'smem constant byte address 0x4 - core index']
  #allocation1 [shape = 'u32[72,128]{1,0:T(1,128)}', space=vmem, size = 0x9000, scoped, tag = 'internal scratch']
  %s0 = inlined_call_operand.vmem [shape: bf16[2,9,9,72], index: 0, kind: input, shape index: {}]
  %s1 = inlined_call_operand.vmem [shape: bf16[4,72,64], index: 1, kind: input, shape index: {}]
  %s2 = inlined_call_operand.vmem [shape: f32[1,64], index: 2, kind: input, shape index: {}]
  %s3 = inlined_call_operand.vmem [shape: bf16[2,8,8,64], index: 3, kind: output, shape index: {}]
  %s4 = sld [smem:[#allocation0]]
  $region45: #{discriminator_forward.3} parent=0
    _
  %s6 = ssub.s32 1, %s4
  %s7 = scalar_select 0, %s6, %s4
  loop: start=0, step=1, limit=4
  $region2: #{discriminator_forward.3} parent=0 // loop_pre_header
    _
  $region3: #{discriminator_forward.3} parent=0 // loop_header
    %s9 = sphi 0, %s13
    %p10 = scmp.ge.s32.totalorder %s9, 4
    %s16 = sphi 0, %s28
    %s17 = sphi 0, %s24
    %s18 = sphi 0, %s16
    %s19 = sphi 0, %s17
    %s20 = sphi 0, %s18
    %s21 = sphi 0, %s19
    %s31 = sphi 0, %s33
    %s34 = sphi 0, %s31
    %s35 = sphi 0, %s34
    %s51 = sphi 0, %s35
    %s55 = sphi 0, %s55
    %s57 = sphi 0, %s55
    %s58 = sphi 0, %s57
    %s72 = sphi 0, %s58
    %s76 = sphi 0, %s76
    %s78 = sphi 0, %s76
    %s79 = sphi 0, %s78
    %s93 = sphi 0, %s79
    %s101 = sphi 0, %s103
    %s104 = sphi 0, %s101
    %s105 = sphi 0, %s104
    %s121 = sphi 0, %s105
  $region4: #{discriminator_forward.3} parent=0 // loop_header_branch
    %12 = sbr.rel (%p10) target = $region8
  $region5: #{discriminator_forward.3} parent=0 // loop_body
    %s14 = ssub.s32 %s9, 1
    %s15 = ssub.s32 %s9, 2
    %s22 = sadd.s32 1, %s17
    %p23 = scmp.ge.s32.totalorder %s22, 1
    %s24 = scalar_select %p23, 0, %s22
    %s25 = sadd.s32 1, %s16
    %s26 = scalar_select %p23, %s25, %s16
    %p27 = scmp.ge.s32.totalorder %s26, 2
    %s28 = scalar_select %p27, 0, %s26
    %s29 = ssub.s32 %s16, %s28
    %p30 = scmp.eq.s32.totalorder %s29, 0
    %s32 = sadd.s32 %s31, 1
    %s33 = scalar_select %p30, %s31, %s32
    %p36 = pneg %p30
    %p37 = scmp.eq.s32.totalorder %s9, 1
    %p38 = por %p36, %p37
    %p39 = scmp.ne.s32.totalorder %s31, %s34
    %p40 = scmp.eq.s32.totalorder %s9, 0
    %p41 = por %p39, %p40
    %p42 = scmp.ne.s32.totalorder %s31, %s34
    %p43 = scmp.eq.s32.totalorder %s14, 1
    %p44 = por %p42, %p43
    %p45 = scmp.ne.s32.totalorder %s34, %s35
    %p46 = scmp.eq.s32.totalorder %s14, 0
    %p47 = por %p45, %p46
    %p48 = scmp.ne.s32.totalorder %s34, %s35
    %p49 = scmp.eq.s32.totalorder %s15, 1
    %p50 = por %p48, %p49
    %p52 = scmp.ne.s32.totalorder %s35, %s51
    %p53 = scmp.eq.s32.totalorder %s15, 0
    %p54 = por %p52, %p53
    %s56 = sadd.s32 %s55, 1
    %p59 = scmp.eq.s32.totalorder %s9, 1
    %p60 = scmp.ne.s32.totalorder %s55, %s57
    %p61 = scmp.eq.s32.totalorder %s9, 0
    %p62 = por %p60, %p61
    %p63 = scmp.ne.s32.totalorder %s55, %s57
    %p64 = scmp.eq.s32.totalorder %s14, 1
    %p65 = por %p63, %p64
    %p66 = scmp.ne.s32.totalorder %s57, %s58
    %p67 = scmp.eq.s32.totalorder %s14, 0
    %p68 = por %p66, %p67
    %p69 = scmp.ne.s32.totalorder %s57, %s58
    %p70 = scmp.eq.s32.totalorder %s15, 1
    %p71 = por %p69, %p70
    %p73 = scmp.ne.s32.totalorder %s58, %s72
    %p74 = scmp.eq.s32.totalorder %s15, 0
    %p75 = por %p73, %p74
    %s77 = sadd.s32 %s76, 1
    %p80 = scmp.eq.s32.totalorder %s9, 1
    %p81 = scmp.ne.s32.totalorder %s76, %s78
    %p82 = scmp.eq.s32.totalorder %s9, 0
    %p83 = por %p81, %p82
    %p84 = scmp.ne.s32.totalorder %s76, %s78
    %p85 = scmp.eq.s32.totalorder %s14, 1
    %p86 = por %p84, %p85
    %p87 = scmp.ne.s32.totalorder %s78, %s79
    %p88 = scmp.eq.s32.totalorder %s14, 0
    %p89 = por %p87, %p88
    %p90 = scmp.ne.s32.totalorder %s78, %s79
    %p91 = scmp.eq.s32.totalorder %s15, 1
    %p92 = por %p90, %p91
    %p94 = scmp.ne.s32.totalorder %s79, %s93
    %p95 = scmp.eq.s32.totalorder %s15, 0
    %p96 = por %p94, %p95
    %s97 = ssub.s32 %s16, %s28
    %s98 = ssub.s32 %s17, %s24
    %s99 = sor.u32 %s97, %s98
    %p100 = scmp.eq.s32.totalorder %s99, 0
    %s102 = sadd.s32 %s101, 1
    %s103 = scalar_select %p100, %s101, %s102
    %p106 = pneg %p100
    %p107 = scmp.eq.s32.totalorder %s9, 1
    %p108 = por %p106, %p107
    %p109 = scmp.ne.s32.totalorder %s101, %s104
    %p110 = scmp.eq.s32.totalorder %s9, 0
    %p111 = por %p109, %p110
    %p112 = scmp.ne.s32.totalorder %s101, %s104
    %p113 = scmp.eq.s32.totalorder %s14, 1
    %p114 = por %p112, %p113
    %p115 = scmp.ne.s32.totalorder %s104, %s105
    %p116 = scmp.eq.s32.totalorder %s14, 0
    %p117 = por %p115, %p116
    %p118 = scmp.ne.s32.totalorder %s104, %s105
    %p119 = scmp.eq.s32.totalorder %s15, 1
    %p120 = por %p118, %p119
    %p122 = scmp.ne.s32.totalorder %s105, %s121
    %p123 = scmp.eq.s32.totalorder %s15, 0
    %p124 = por %p122, %p123
    %p125 = scmp.le.s32.totalorder 1, %s9
    %p126 = scmp.lt.s32.totalorder %s9, 3
    %p127 = pnand %p125, %p126
    %p128 = pneg %p127
    // Predicated region
    $region9: #{discriminator_forward.3} parent=5 // pred_check
      _
    $region10: #{discriminator_forward.3} parent=5 // pred_check_branch
      %130 = sbr.rel (%p127) target = $region12
    $region11: #{discriminator_forward.3} parent=5 // pred_region
      %s131 = ssub.s32 %s9, 1
      // Predicated region
      $region13: #{discriminator_forward.3} parent=11 // pred_check
        %p132 = pneg %p68
      $region14: #{discriminator_forward.3} parent=11 // pred_check_branch
        %134 = sbr.rel (%p132) target = $region16
      $region15: #{discriminator_forward.3} parent=11 // pred_region
        _
      $region16: #{discriminator_forward.3} parent=11 // pred_fallthru
        _
      // Predicated region
      $region17: #{discriminator_forward.3} parent=11 // pred_check
        %p135 = pneg %p89
      $region18: #{discriminator_forward.3} parent=11 // pred_check_branch
        %137 = sbr.rel (%p135) target = $region20
      $region19: #{discriminator_forward.3} parent=11 // pred_region
        _
      $region20: #{discriminator_forward.3} parent=11 // pred_fallthru
        _
    $region12: #{discriminator_forward.3} parent=5 // pred_fallthru
      _
    %p138 = scmp.lt.s32.totalorder %s9, 2
    // Predicated region
    $region21: #{discriminator_forward.3} parent=5 // pred_check
      %p139 = pneg %p138
    $region22: #{discriminator_forward.3} parent=5 // pred_check_branch
      %141 = sbr.rel (%p139) target = $region24
    $region23: #{discriminator_forward.3} parent=5 // pred_region
      // Predicated region
      $region25: #{discriminator_forward.3} parent=23 // pred_check
        %p142 = pneg %p41
      $region26: #{discriminator_forward.3} parent=23 // pred_check_branch
        %144 = sbr.rel (%p142) target = $region28
      $region27: #{discriminator_forward.3} parent=23 // pred_region
        %p145 = scmp.lt.s32.totalorder %s16, 1
        %s146 = scalar_select %p145, %s16, 1
        %s147 = smul.addr %s146, 18
        %s148 = smul.addr %s147, 4
        %s149 = scalar_lea.vmem %s0, %s148
      $region28: #{discriminator_forward.3} parent=23 // pred_fallthru
        _
    $region24: #{discriminator_forward.3} parent=5 // pred_fallthru
      _
    %p150 = scmp.le.s32.totalorder 1, %s9
    %p151 = scmp.lt.s32.totalorder %s9, 3
    %p152 = pnand %p150, %p151
    %p153 = pneg %p152
    // Predicated region
    $region29: #{discriminator_forward.3} parent=5 // pred_check
      _
    $region30: #{discriminator_forward.3} parent=5 // pred_check_branch
      %155 = sbr.rel (%p152) target = $region32
    $region31: #{discriminator_forward.3} parent=5 // pred_region
      %s156 = ssub.s32 %s9, 1
      %p157 = scmp.lt.s32.totalorder %s18, 1
      %s158 = scalar_select %p157, %s18, 1
      %s159 = smul.addr %s158, 18
      %s160 = smul.addr %s159, 4
      %s161 = scalar_lea.vmem %s0, %s160
      %p162 = pneg %p47
      %p163 = pneg %p44
      %p164 = pneg %p68
      %p165 = pneg %p65
      %p166 = pneg %p89
      %p167 = pneg %p86
      %p168 = pneg %p117
      %p169 = pneg %p114
      %s170 = smul.u32 8, %s19
      %p171 = scmp.lt.s32.totalorder %s18, 1
      %s172 = scalar_select %p171, %s18, 1
      %p173 = scmp.lt.s32.totalorder %s170, 7
      %s174 = scalar_select %p173, %s170, 7
      %s175 = smul.addr %s172, 8
      %s176 = sadd.s32 %s174, %s175
      %s177 = smul.addr %s176, 4
      %s178 = scalar_lea.vmem %s3, %s177
      %p179 = scmp.lt.s32.totalorder %s18, 1
      %s180 = scalar_select %p179, %s18, 1
      %s181 = smul.addr %s180, 18
      %s182 = smul.addr %s181, 4
      %s183 = scalar_lea.vmem %s0, %s182
      %s184 = smul.u32 8, %s19
      %p185 = scmp.lt.s32.totalorder %s18, 1
      %s186 = scalar_select %p185, %s18, 1
      %p187 = scmp.lt.s32.totalorder %s184, 7
      %s188 = scalar_select %p187, %s184, 7
      %s189 = smul.addr %s186, 8
      %s190 = sadd.s32 %s188, %s189
      %s191 = smul.addr %s190, 4
      %s192 = scalar_lea.vmem %s3, %s191
      %s193 = smul.u32 8, %s19
      %s195 = smul.u32 %s19, 8
      %s196 = smul.u32 %s195, 2
      %s197 = smul.addr %s196, 4
      %s198 = scalar_lea.vmem %s183, %s197
      %v199 = vld [vmem:[%s198] sm:$0xf]
      %v200 = vld [vmem:[%s198 + $0x8] sm:$0xf]
      %v201 = vld [vmem:[%s198 + $0x10] sm:$0xf]
      %v202 = vld [vmem:[%s198 + $0x18] sm:$0xf]
      %v203 = vld [vmem:[%s198 + $0x20] sm:$0xf]
      %v204 = vld [vmem:[%s198 + $0x28] sm:$0xf]
      %v205 = vld [vmem:[%s198 + $0x30] sm:$0xf]
      %v206 = vld [vmem:[%s198 + $0x38] sm:$0xf]
      %v207 = vld [vmem:[%s1] sm:$0xf]
      %v208 = vld [vmem:[%s1 + $0x4] sm:$0xf]
      %v209 = vld [vmem:[%s1 + $0x8] sm:$0xf]
      %v210 = vld [vmem:[%s1 + $0xc] sm:$0xf]
      %v211 = vld [vmem:[%s1 + $0x10] sm:$0xf]
      %v212 = vld [vmem:[%s1 + $0x14] sm:$0xf]
      %v213 = vld [vmem:[%s1 + $0x18] sm:$0xf]
      %v214 = vld [vmem:[%s1 + $0x1c] sm:$0xf]
      %v215 = vld [vmem:[%s1 + $0x20] sm:$0xf]
      %v216 = vld [vmem:[%s198 + $0x4] sm:$0x1]
      %v217 = vld [vmem:[%s198 + $0xc] sm:$0x1]
      %v218 = vld [vmem:[%s198 + $0x14] sm:$0x1]
      %v219 = vld [vmem:[%s198 + $0x1c] sm:$0x1]
      %v220 = vld [vmem:[%s198 + $0x24] sm:$0x1]
      %v221 = vld [vmem:[%s198 + $0x2c] sm:$0x1]
      %v222 = vld [vmem:[%s198 + $0x34] sm:$0x1]
      %v223 = vld [vmem:[%s198 + $0x3c] sm:$0x1]
      %vm224 = vsmask.f32 3328
      %vm225 = vsmask.f32 7440
      %vm226 = vmor %vm224, %vm225
      %v228 = vshrl.u32 %v199, 16
      %v230 = vrot.slane %v228, 4
      %v231 = vshll.u32 %v199, 16
      %v233 = vrot.slane %v231, 5
      %v234 = vor.u32 %v230, %v233
      %v235 = vrot.slane %v234, 4
      %v237 = vshll.u32 %v216, 16
      %v239 = vrot.slane %v237, 5
      %v240 = vsel %vm226, %v235, %v239
      %v242 = vshrl.u32 %v200, 16
      %v244 = vrot.slane %v242, 4
      %v245 = vshll.u32 %v200, 16
      %v247 = vrot.slane %v245, 5
      %v248 = vor.u32 %v244, %v247
      %v249 = vrot.slane %v248, 4
      %v251 = vshll.u32 %v217, 16
      %v253 = vrot.slane %v251, 5
      %v254 = vsel %vm226, %v249, %v253
      %v256 = vshrl.u32 %v201, 16
      %v258 = vrot.slane %v256, 4
      %v259 = vshll.u32 %v201, 16
      %v261 = vrot.slane %v259, 5
      %v262 = vor.u32 %v258, %v261
      %v263 = vrot.slane %v262, 4
      %v265 = vshll.u32 %v218, 16
      %v267 = vrot.slane %v265, 5
      %v268 = vsel %vm226, %v263, %v267
      %v270 = vshrl.u32 %v202, 16
      %v272 = vrot.slane %v270, 4
      %v273 = vshll.u32 %v202, 16
      %v275 = vrot.slane %v273, 5
      %v276 = vor.u32 %v272, %v275
      %v277 = vrot.slane %v276, 4
      %v279 = vshll.u32 %v219, 16
      %v281 = vrot.slane %v279, 5
      %v282 = vsel %vm226, %v277, %v281
      %v284 = vshrl.u32 %v203, 16
      %v286 = vrot.slane %v284, 4
      %v287 = vshll.u32 %v203, 16
      %v289 = vrot.slane %v287, 5
      %v290 = vor.u32 %v286, %v289
      %v291 = vrot.slane %v290, 4
      %v293 = vshll.u32 %v220, 16
      %v295 = vrot.slane %v293, 5
      %v296 = vsel %vm226, %v291, %v295
      %v298 = vshrl.u32 %v204, 16
      %v300 = vrot.slane %v298, 4
      %v301 = vshll.u32 %v204, 16
      %v303 = vrot.slane %v301, 5
      %v304 = vor.u32 %v300, %v303
      %v305 = vrot.slane %v304, 4
      %v307 = vshll.u32 %v221, 16
      %v309 = vrot.slane %v307, 5
      %v310 = vsel %vm226, %v305, %v309
      %v312 = vshrl.u32 %v205, 16
      %v314 = vrot.slane %v312, 4
      %v315 = vshll.u32 %v205, 16
      %v317 = vrot.slane %v315, 5
      %v318 = vor.u32 %v314, %v317
      %v319 = vrot.slane %v318, 4
      %v321 = vshll.u32 %v222, 16
      %v323 = vrot.slane %v321, 5
      %v324 = vsel %vm226, %v319, %v323
      %v326 = vshrl.u32 %v206, 16
      %v328 = vrot.slane %v326, 4
      %v329 = vshll.u32 %v206, 16
      %v331 = vrot.slane %v329, 5
      %v332 = vor.u32 %v328, %v331
      %v333 = vrot.slane %v332, 4
      %v335 = vshll.u32 %v223, 16
      %v337 = vrot.slane %v335, 5
      %v338 = vsel %vm226, %v333, %v337
      %s339 = scalar_lea.vmem %s1, 36
      %v340 = vld [vmem:[%s339] sm:$0xf]
      %v341 = vld [vmem:[%s339 + $0x4] sm:$0xf]
      %v342 = vld [vmem:[%s339 + $0x8] sm:$0xf]
      %v343 = vld [vmem:[%s339 + $0xc] sm:$0xf]
      %v344 = vld [vmem:[%s339 + $0x10] sm:$0xf]
      %v345 = vld [vmem:[%s339 + $0x14] sm:$0xf]
      %v346 = vld [vmem:[%s339 + $0x18] sm:$0xf]
      %v347 = vld [vmem:[%s339 + $0x1c] sm:$0xf]
      %v348 = vld [vmem:[%s339 + $0x20] sm:$0xf]
      %v349 = vunpack.c.l.b16 %v240
      %v350 = vunpack.c.l.b16 %v254
      %v351 = vunpack.c.l.b16 %v268
      %v352 = vunpack.c.l.b16 %v282
      %v353 = vunpack.c.l.b16 %v296
      %v354 = vunpack.c.l.b16 %v310
      %v355 = vunpack.c.l.b16 %v324
      %v356 = vunpack.c.l.b16 %v338
      %v357 = vpack.c.b16 %v350, %v349
      %v358 = vpack.c.b16 %v352, %v351
      %v359 = vpack.c.b16 %v354, %v353
      %v360 = vpack.c.b16 %v356, %v355
      %v370 = vunpack.c.l.b16 %v340
      %v371 = vunpack.c.l.b16 %v341
      %v372 = vunpack.c.l.b16 %v342
      %v373 = vunpack.c.l.b16 %v343
      %v374 = vunpack.c.l.b16 %v344
      %v375 = vunpack.c.l.b16 %v345
      %v376 = vunpack.c.l.b16 %v346
      %v377 = vunpack.c.l.b16 %v347
      %v378 = vunpack.c.l.b16 %v348
      %v379 = vpack.c.b16 %v371, %v370
      %v380 = vpack.c.b16 %v373, %v372
      %v381 = vpack.c.b16 %v375, %v374
      %v382 = vpack.c.b16 %v377, %v376
      %v383 = vpack.c.b16 %v378, %v378
      %vm388 = vcmask 588800
      %v390 = vsel %vm388, %v357, 0
      %v393 = vsel %vm388, %v358, 0
      %v396 = vsel %vm388, %v359, 0
      %v399 = vsel %vm388, %v360, 0
      %vm401 = vcmask 1043456
      %v403 = vsel %vm401, %v383, 0
      %405 = vmatpush.bf16.msra.mxu0 0
      %406 = vmatpush.bf16.msra.mxu0 0
      %407 = vmatpush.bf16.msra.mxu0 0
      %408 = vmatpush.bf16.msra.mxu0 %v403
      %409 = vmatpush.bf16.msra.mxu0 %v382
      %410 = vmatpush.bf16.msra.mxu0 %v381
      %411 = vmatpush.bf16.msra.mxu0 %v380
      %412 = vmatpush.bf16.msra.mxu0 %v379
      %413 = vmatmul.bf16.gmra.mxu0 %v390
      %v414 = vpop.f32.mrf.mxu0
      %v415 = vadd.f32 0.0, %v414
      %v416 = vpop.f32.mrf.mxu0
      %v417 = vadd.f32 0.0, %v416
      %418 = vmatmul.bf16.gmra.mxu0 %v393
      %v419 = vpop.f32.mrf.mxu0
      %v420 = vadd.f32 0.0, %v419
      %v421 = vpop.f32.mrf.mxu0
      %v422 = vadd.f32 0.0, %v421
      %423 = vmatmul.bf16.gmra.mxu0 %v396
      %v424 = vpop.f32.mrf.mxu0
      %v425 = vadd.f32 0.0, %v424
      %v426 = vpop.f32.mrf.mxu0
      %v427 = vadd.f32 0.0, %v426
      %428 = vmatmul.bf16.gmra.mxu0 %v399
      %v429 = vpop.f32.mrf.mxu0
      %v430 = vadd.f32 0.0, %v429
      %v431 = vpop.f32.mrf.mxu0
      %v432 = vadd.f32 0.0, %v431
      %433 = vdwg.mxu0
      %v442 = vunpack.c.l.b16 %v199
      %v443 = vunpack.c.l.b16 %v200
      %v444 = vunpack.c.l.b16 %v201
      %v445 = vunpack.c.l.b16 %v202
      %v446 = vunpack.c.l.b16 %v203
      %v447 = vunpack.c.l.b16 %v204
      %v448 = vunpack.c.l.b16 %v205
      %v449 = vunpack.c.l.b16 %v206
      %v450 = vpack.c.b16 %v443, %v442
      %v451 = vpack.c.b16 %v445, %v444
      %v452 = vpack.c.b16 %v447, %v446
      %v453 = vpack.c.b16 %v449, %v448
      %v463 = vunpack.c.l.b16 %v207
      %v464 = vunpack.c.l.b16 %v208
      %v465 = vunpack.c.l.b16 %v209
      %v466 = vunpack.c.l.b16 %v210
      %v467 = vunpack.c.l.b16 %v211
      %v468 = vunpack.c.l.b16 %v212
      %v469 = vunpack.c.l.b16 %v213
      %v470 = vunpack.c.l.b16 %v214
      %v471 = vunpack.c.l.b16 %v215
      %v472 = vpack.c.b16 %v464, %v463
      %v473 = vpack.c.b16 %v466, %v465
      %v474 = vpack.c.b16 %v468, %v467
      %v475 = vpack.c.b16 %v470, %v469
      %v476 = vpack.c.b16 %v471, %v471
      %v482 = vsel %vm388, %v450, 0
      %v485 = vsel %vm388, %v451, 0
      %v488 = vsel %vm388, %v452, 0
      %v491 = vsel %vm388, %v453, 0
      %v494 = vsel %vm401, %v476, 0
      %496 = vmatpush.bf16.msra.mxu0 0
      %497 = vmatpush.bf16.msra.mxu0 0
      %498 = vmatpush.bf16.msra.mxu0 0
      %499 = vmatpush.bf16.msra.mxu0 %v494
      %500 = vmatpush.bf16.msra.mxu0 %v475
      %501 = vmatpush.bf16.msra.mxu0 %v474
      %502 = vmatpush.bf16.msra.mxu0 %v473
      %503 = vmatpush.bf16.msra.mxu0 %v472
      %504 = vmatmul.bf16.gmra.mxu0 %v482
      %v505 = vpop.f32.mrf.mxu0
      %v506 = vadd.f32 %v415, %v505
      %v507 = vpop.f32.mrf.mxu0
      %v508 = vadd.f32 %v417, %v507
      %509 = vmatmul.bf16.gmra.mxu0 %v485
      %v510 = vpop.f32.mrf.mxu0
      %v511 = vadd.f32 %v420, %v510
      %v512 = vpop.f32.mrf.mxu0
      %v513 = vadd.f32 %v422, %v512
      %514 = vmatmul.bf16.gmra.mxu0 %v488
      %v515 = vpop.f32.mrf.mxu0
      %v516 = vadd.f32 %v425, %v515
      %v517 = vpop.f32.mrf.mxu0
      %v518 = vadd.f32 %v427, %v517
      %519 = vmatmul.bf16.gmra.mxu0 %v491
      %v520 = vpop.f32.mrf.mxu0
      %v521 = vadd.f32 %v430, %v520
      %v522 = vpop.f32.mrf.mxu0
      %v523 = vadd.f32 %v432, %v522
      %524 = vdwg.mxu0
      %s525 = sadd.s32 %s195, 1
      %s526 = smul.u32 %s525, 2
      %s527 = smul.addr %s526, 4
      %s528 = scalar_lea.vmem %s183, %s527
      %v529 = vld [vmem:[%s528] sm:$0xf]
      %v530 = vld [vmem:[%s528 + $0x8] sm:$0xf]
      %v531 = vld [vmem:[%s528 + $0x10] sm:$0xf]
      %v532 = vld [vmem:[%s528 + $0x18] sm:$0xf]
      %v533 = vld [vmem:[%s528 + $0x20] sm:$0xf]
      %v534 = vld [vmem:[%s528 + $0x28] sm:$0xf]
      %v535 = vld [vmem:[%s528 + $0x30] sm:$0xf]
      %v536 = vld [vmem:[%s528 + $0x38] sm:$0xf]
      %s537 = scalar_lea.vmem %s1, 72
      %v538 = vld [vmem:[%s537] sm:$0xf]
      %v539 = vld [vmem:[%s537 + $0x4] sm:$0xf]
      %v540 = vld [vmem:[%s537 + $0x8] sm:$0xf]
      %v541 = vld [vmem:[%s537 + $0xc] sm:$0xf]
      %v542 = vld [vmem:[%s537 + $0x10] sm:$0xf]
      %v543 = vld [vmem:[%s537 + $0x14] sm:$0xf]
      %v544 = vld [vmem:[%s537 + $0x18] sm:$0xf]
      %v545 = vld [vmem:[%s537 + $0x1c] sm:$0xf]
      %v546 = vld [vmem:[%s537 + $0x20] sm:$0xf]
      %v555 = vunpack.c.l.b16 %v529
      %v556 = vunpack.c.l.b16 %v530
      %v557 = vunpack.c.l.b16 %v531
      %v558 = vunpack.c.l.b16 %v532
      %v559 = vunpack.c.l.b16 %v533
      %v560 = vunpack.c.l.b16 %v534
      %v561 = vunpack.c.l.b16 %v535
      %v562 = vunpack.c.l.b16 %v536
      %v563 = vpack.c.b16 %v556, %v555
      %v564 = vpack.c.b16 %v558, %v557
      %v565 = vpack.c.b16 %v560, %v559
      %v566 = vpack.c.b16 %v562, %v561
      %v576 = vunpack.c.l.b16 %v538
      %v577 = vunpack.c.l.b16 %v539
      %v578 = vunpack.c.l.b16 %v540
      %v579 = vunpack.c.l.b16 %v541
      %v580 = vunpack.c.l.b16 %v542
      %v581 = vunpack.c.l.b16 %v543
      %v582 = vunpack.c.l.b16 %v544
      %v583 = vunpack.c.l.b16 %v545
      %v584 = vunpack.c.l.b16 %v546
      %v585 = vpack.c.b16 %v577, %v576
      %v586 = vpack.c.b16 %v579, %v578
      %v587 = vpack.c.b16 %v581, %v580
      %v588 = vpack.c.b16 %v583, %v582
      %v589 = vpack.c.b16 %v584, %v584
      %v595 = vsel %vm388, %v563, 0
      %v598 = vsel %vm388, %v564, 0
      %v601 = vsel %vm388, %v565, 0
      %v604 = vsel %vm388, %v566, 0
      %v607 = vsel %vm401, %v589, 0
      %609 = vmatpush.bf16.msra.mxu0 0
      %610 = vmatpush.bf16.msra.mxu0 0
      %611 = vmatpush.bf16.msra.mxu0 0
      %612 = vmatpush.bf16.msra.mxu0 %v607
      %613 = vmatpush.bf16.msra.mxu0 %v588
      %614 = vmatpush.bf16.msra.mxu0 %v587
      %615 = vmatpush.bf16.msra.mxu0 %v586
      %616 = vmatpush.bf16.msra.mxu0 %v585
      %617 = vmatmul.bf16.gmra.mxu0 %v595
      %v618 = vpop.f32.mrf.mxu0
      %v619 = vadd.f32 0.0, %v618
      %v620 = vpop.f32.mrf.mxu0
      %v621 = vadd.f32 0.0, %v620
      %622 = vmatmul.bf16.gmra.mxu0 %v598
      %v623 = vpop.f32.mrf.mxu0
      %v624 = vadd.f32 0.0, %v623
      %v625 = vpop.f32.mrf.mxu0
      %v626 = vadd.f32 0.0, %v625
      %627 = vmatmul.bf16.gmra.mxu0 %v601
      %v628 = vpop.f32.mrf.mxu0
      %v629 = vadd.f32 0.0, %v628
      %v630 = vpop.f32.mrf.mxu0
      %v631 = vadd.f32 0.0, %v630
      %632 = vmatmul.bf16.gmra.mxu0 %v604
      %v633 = vpop.f32.mrf.mxu0
      %v634 = vadd.f32 0.0, %v633
      %v635 = vpop.f32.mrf.mxu0
      %v636 = vadd.f32 0.0, %v635
      %637 = vdwg.mxu0
      %v638 = vadd.f32 %v506, %v619
      %v639 = vadd.f32 %v508, %v621
      %v640 = vadd.f32 %v511, %v624
      %v641 = vadd.f32 %v513, %v626
      %v642 = vadd.f32 %v516, %v629
      %v643 = vadd.f32 %v518, %v631
      %v644 = vadd.f32 %v521, %v634
      %v645 = vadd.f32 %v523, %v636
      %v646 = vld [vmem:[%s528] sm:$0xf]
      %v647 = vld [vmem:[%s528 + $0x4] sm:$0x1]
      %v648 = vld [vmem:[%s528 + $0x8] sm:$0xf]
      %v649 = vld [vmem:[%s528 + $0xc] sm:$0x1]
      %v650 = vld [vmem:[%s528 + $0x10] sm:$0xf]
      %v651 = vld [vmem:[%s528 + $0x14] sm:$0x1]
      %v652 = vld [vmem:[%s528 + $0x18] sm:$0xf]
      %v653 = vld [vmem:[%s528 + $0x1c] sm:$0x1]
      %v654 = vld [vmem:[%s528 + $0x20] sm:$0xf]
      %v655 = vld [vmem:[%s528 + $0x24] sm:$0x1]
      %v656 = vld [vmem:[%s528 + $0x28] sm:$0xf]
      %v657 = vld [vmem:[%s528 + $0x2c] sm:$0x1]
      %v658 = vld [vmem:[%s528 + $0x30] sm:$0xf]
      %v659 = vld [vmem:[%s528 + $0x34] sm:$0x1]
      %v660 = vld [vmem:[%s528 + $0x38] sm:$0xf]
      %v661 = vld [vmem:[%s528 + $0x3c] sm:$0x1]
      %v663 = vshrl.u32 %v646, 16
      %v665 = vrot.slane %v663, 4
      %v666 = vshll.u32 %v646, 16
      %v668 = vrot.slane %v666, 5
      %v669 = vor.u32 %v665, %v668
      %v670 = vrot.slane %v669, 4
      %v672 = vshll.u32 %v647, 16
      %v674 = vrot.slane %v672, 5
      %v675 = vsel %vm226, %v670, %v674
      %v677 = vshrl.u32 %v648, 16
      %v679 = vrot.slane %v677, 4
      %v680 = vshll.u32 %v648, 16
      %v682 = vrot.slane %v680, 5
      %v683 = vor.u32 %v679, %v682
      %v684 = vrot.slane %v683, 4
      %v686 = vshll.u32 %v649, 16
      %v688 = vrot.slane %v686, 5
      %v689 = vsel %vm226, %v684, %v688
      %v691 = vshrl.u32 %v650, 16
      %v693 = vrot.slane %v691, 4
      %v694 = vshll.u32 %v650, 16
      %v696 = vrot.slane %v694, 5
      %v697 = vor.u32 %v693, %v696
      %v698 = vrot.slane %v697, 4
      %v700 = vshll.u32 %v651, 16
      %v702 = vrot.slane %v700, 5
      %v703 = vsel %vm226, %v698, %v702
      %v705 = vshrl.u32 %v652, 16
      %v707 = vrot.slane %v705, 4
      %v708 = vshll.u32 %v652, 16
      %v710 = vrot.slane %v708, 5
      %v711 = vor.u32 %v707, %v710
      %v712 = vrot.slane %v711, 4
      %v714 = vshll.u32 %v653, 16
      %v716 = vrot.slane %v714, 5
      %v717 = vsel %vm226, %v712, %v716
      %v719 = vshrl.u32 %v654, 16
      %v721 = vrot.slane %v719, 4
      %v722 = vshll.u32 %v654, 16
      %v724 = vrot.slane %v722, 5
      %v725 = vor.u32 %v721, %v724
      %v726 = vrot.slane %v725, 4
      %v728 = vshll.u32 %v655, 16
      %v730 = vrot.slane %v728, 5
      %v731 = vsel %vm226, %v726, %v730
      %v733 = vshrl.u32 %v656, 16
      %v735 = vrot.slane %v733, 4
      %v736 = vshll.u32 %v656, 16
      %v738 = vrot.slane %v736, 5
      %v739 = vor.u32 %v735, %v738
      %v740 = vrot.slane %v739, 4
      %v742 = vshll.u32 %v657, 16
      %v744 = vrot.slane %v742, 5
      %v745 = vsel %vm226, %v740, %v744
      %v747 = vshrl.u32 %v658, 16
      %v749 = vrot.slane %v747, 4
      %v750 = vshll.u32 %v658, 16
      %v752 = vrot.slane %v750, 5
      %v753 = vor.u32 %v749, %v752
      %v754 = vrot.slane %v753, 4
      %v756 = vshll.u32 %v659, 16
      %v758 = vrot.slane %v756, 5
      %v759 = vsel %vm226, %v754, %v758
      %v761 = vshrl.u32 %v660, 16
      %v763 = vrot.slane %v761, 4
      %v764 = vshll.u32 %v660, 16
      %v766 = vrot.slane %v764, 5
      %v767 = vor.u32 %v763, %v766
      %v768 = vrot.slane %v767, 4
      %v770 = vshll.u32 %v661, 16
      %v772 = vrot.slane %v770, 5
      %v773 = vsel %vm226, %v768, %v772
      %s774 = scalar_lea.vmem %s1, 108
      %v775 = vld [vmem:[%s774] sm:$0xf]
      %v776 = vld [vmem:[%s774 + $0x4] sm:$0xf]
      %v777 = vld [vmem:[%s774 + $0x8] sm:$0xf]
      %v778 = vld [vmem:[%s774 + $0xc] sm:$0xf]
      %v779 = vld [vmem:[%s774 + $0x10] sm:$0xf]
      %v780 = vld [vmem:[%s774 + $0x14] sm:$0xf]
      %v781 = vld [vmem:[%s774 + $0x18] sm:$0xf]
      %v782 = vld [vmem:[%s774 + $0x1c] sm:$0xf]
      %v783 = vld [vmem:[%s774 + $0x20] sm:$0xf]
      %v784 = vunpack.c.l.b16 %v675
      %v785 = vunpack.c.l.b16 %v689
      %v786 = vunpack.c.l.b16 %v703
      %v787 = vunpack.c.l.b16 %v717
      %v788 = vunpack.c.l.b16 %v731
      %v789 = vunpack.c.l.b16 %v745
      %v790 = vunpack.c.l.b16 %v759
      %v791 = vunpack.c.l.b16 %v773
      %v792 = vpack.c.b16 %v785, %v784
      %v793 = vpack.c.b16 %v787, %v786
      %v794 = vpack.c.b16 %v789, %v788
      %v795 = vpack.c.b16 %v791, %v790
      %v805 = vunpack.c.l.b16 %v775
      %v806 = vunpack.c.l.b16 %v776
      %v807 = vunpack.c.l.b16 %v777
      %v808 = vunpack.c.l.b16 %v778
      %v809 = vunpack.c.l.b16 %v779
      %v810 = vunpack.c.l.b16 %v780
      %v811 = vunpack.c.l.b16 %v781
      %v812 = vunpack.c.l.b16 %v782
      %v813 = vunpack.c.l.b16 %v783
      %v814 = vpack.c.b16 %v806, %v805
      %v815 = vpack.c.b16 %v808, %v807
      %v816 = vpack.c.b16 %v810, %v809
      %v817 = vpack.c.b16 %v812, %v811
      %v818 = vpack.c.b16 %v813, %v813
      %v824 = vsel %vm388, %v792, 0
      %v827 = vsel %vm388, %v793, 0
      %v830 = vsel %vm388, %v794, 0
      %v833 = vsel %vm388, %v795, 0
      %v836 = vsel %vm401, %v818, 0
      %838 = vmatpush.bf16.msra.mxu0 0
      %839 = vmatpush.bf16.msra.mxu0 0
      %840 = vmatpush.bf16.msra.mxu0 0
      %841 = vmatpush.bf16.msra.mxu0 %v836
      %842 = vmatpush.bf16.msra.mxu0 %v817
      %843 = vmatpush.bf16.msra.mxu0 %v816
      %844 = vmatpush.bf16.msra.mxu0 %v815
      %845 = vmatpush.bf16.msra.mxu0 %v814
      %846 = vmatmul.bf16.gmra.mxu0 %v824
      %v847 = vpop.f32.mrf.mxu0
      %v848 = vadd.f32 0.0, %v847
      %v849 = vpop.f32.mrf.mxu0
      %v850 = vadd.f32 0.0, %v849
      %851 = vmatmul.bf16.gmra.mxu0 %v827
      %v852 = vpop.f32.mrf.mxu0
      %v853 = vadd.f32 0.0, %v852
      %v854 = vpop.f32.mrf.mxu0
      %v855 = vadd.f32 0.0, %v854
      %856 = vmatmul.bf16.gmra.mxu0 %v830
      %v857 = vpop.f32.mrf.mxu0
      %v858 = vadd.f32 0.0, %v857
      %v859 = vpop.f32.mrf.mxu0
      %v860 = vadd.f32 0.0, %v859
      %861 = vmatmul.bf16.gmra.mxu0 %v833
      %v862 = vpop.f32.mrf.mxu0
      %v863 = vadd.f32 0.0, %v862
      %v864 = vpop.f32.mrf.mxu0
      %v865 = vadd.f32 0.0, %v864
      %866 = vdwg.mxu0
      %v867 = vadd.f32 %v638, %v848
      %v868 = vadd.f32 %v639, %v850
      %v869 = vadd.f32 %v640, %v853
      %v870 = vadd.f32 %v641, %v855
      %v871 = vadd.f32 %v642, %v858
      %v872 = vadd.f32 %v643, %v860
      %v873 = vadd.f32 %v644, %v863
      %v874 = vadd.f32 %v645, %v865
      %v875 = vld [vmem:[%s2] sm:$0x1]
      %v877 = vperm.slane %v875, 0
      %v879 = vadd.f32 %v867, %v877
      %v880 = vadd.f32 %v868, %v877
      %v881 = vadd.f32 %v869, %v877
      %v882 = vadd.f32 %v870, %v877
      %v883 = vadd.f32 %v871, %v877
      %v884 = vadd.f32 %v872, %v877
      %v885 = vadd.f32 %v873, %v877
      %v886 = vadd.f32 %v874, %v877
      %vm887 = vcmp.ge.f32.partialorder %v879, 0.0
      %vm888 = vcmp.ge.f32.partialorder %v880, 0.0
      %vm889 = vcmp.ge.f32.partialorder %v881, 0.0
      %vm890 = vcmp.ge.f32.partialorder %v882, 0.0
      %vm891 = vcmp.ge.f32.partialorder %v883, 0.0
      %vm892 = vcmp.ge.f32.partialorder %v884, 0.0
      %vm893 = vcmp.ge.f32.partialorder %v885, 0.0
      %vm894 = vcmp.ge.f32.partialorder %v886, 0.0
      %v895 = vmul.f32 %v879, 0.2
      %v896 = vmul.f32 %v880, 0.2
      %v897 = vmul.f32 %v881, 0.2
      %v898 = vmul.f32 %v882, 0.2
      %v899 = vmul.f32 %v883, 0.2
      %v900 = vmul.f32 %v884, 0.2
      %v901 = vmul.f32 %v885, 0.2
      %v902 = vmul.f32 %v886, 0.2
      %v903 = vsel %vm887, %v879, %v895
      %v904 = vsel %vm888, %v880, %v896
      %v905 = vsel %vm889, %v881, %v897
      %v906 = vsel %vm890, %v882, %v898
      %v907 = vsel %vm891, %v883, %v899
      %v908 = vsel %vm892, %v884, %v900
      %v909 = vsel %vm893, %v885, %v901
      %v910 = vsel %vm894, %v886, %v902
      %v911 = vpack.c.bf16 %v903, %v903
      %v912 = vpack.c.bf16 %v904, %v904
      %v913 = vpack.c.bf16 %v905, %v905
      %v914 = vpack.c.bf16 %v906, %v906
      %v915 = vpack.c.bf16 %v907, %v907
      %v916 = vpack.c.bf16 %v908, %v908
      %v917 = vpack.c.bf16 %v909, %v909
      %v918 = vpack.c.bf16 %v910, %v910
      %vm919 = vcmask 519168
      %920 = vst.msk [vmem:[%s192] sm:$0xf] %vm919, %v911
      %921 = vst.msk [vmem:[%s192 + $0x4] sm:$0xf] %vm919, %v912
      %922 = vst.msk [vmem:[%s192 + $0x8] sm:$0xf] %vm919, %v913
      %923 = vst.msk [vmem:[%s192 + $0xc] sm:$0xf] %vm919, %v914
      %924 = vst.msk [vmem:[%s192 + $0x10] sm:$0xf] %vm919, %v915
      %925 = vst.msk [vmem:[%s192 + $0x14] sm:$0xf] %vm919, %v916
      %926 = vst.msk [vmem:[%s192 + $0x18] sm:$0xf] %vm919, %v917
      %927 = vst.msk [vmem:[%s192 + $0x1c] sm:$0xf] %vm919, %v918
      %s928 = smul.u32 8, %s19
      %p929 = scmp.lt.s32.totalorder %s18, 1
      %s930 = scalar_select %p929, %s18, 1
      %p931 = scmp.lt.s32.totalorder %s928, 7
      %s932 = scalar_select %p931, %s928, 7
      %s933 = smul.addr %s930, 8
      %s934 = sadd.s32 %s932, %s933
      %s935 = smul.addr %s934, 4
      %s936 = scalar_lea.vmem %s3, %s935
      // Predicated region
      $region33: #{discriminator_forward.3} parent=31 // pred_check
        %p937 = pneg %p114
      $region34: #{discriminator_forward.3} parent=31 // pred_check_branch
        %939 = sbr.rel (%p937) target = $region36
      $region35: #{discriminator_forward.3} parent=31 // pred_region
        %s940 = smul.u32 8, %s19
      $region36: #{discriminator_forward.3} parent=31 // pred_fallthru
        _
    $region32: #{discriminator_forward.3} parent=5 // pred_fallthru
      _
    %p941 = scmp.le.s32.totalorder 2, %s9
    // Predicated region
    $region37: #{discriminator_forward.3} parent=5 // pred_check
      %p942 = pneg %p941
    $region38: #{discriminator_forward.3} parent=5 // pred_check_branch
      %944 = sbr.rel (%p942) target = $region40
    $region39: #{discriminator_forward.3} parent=5 // pred_region
      %s945 = ssub.s32 %s9, 2
      // Predicated region
      $region41: #{discriminator_forward.3} parent=39 // pred_check
        %p946 = pneg %p120
      $region42: #{discriminator_forward.3} parent=39 // pred_check_branch
        %948 = sbr.rel (%p946) target = $region44
      $region43: #{discriminator_forward.3} parent=39 // pred_region
        %s949 = smul.u32 8, %s21
        %p950 = scmp.lt.s32.totalorder %s20, 1
        %s951 = scalar_select %p950, %s20, 1
        %p952 = scmp.lt.s32.totalorder %s949, 7
        %s953 = scalar_select %p952, %s949, 7
        %s954 = smul.addr %s951, 8
        %s955 = sadd.s32 %s953, %s954
        %s956 = smul.addr %s955, 4
        %s957 = scalar_lea.vmem %s3, %s956
      $region44: #{discriminator_forward.3} parent=39 // pred_fallthru
        _
    $region40: #{discriminator_forward.3} parent=5 // pred_fallthru
      _
  $region6: #{discriminator_forward.3} parent=0 // loop_footer
    %s13 = sadd.s32 1, %s9
  $region7: #{discriminator_forward.3} parent=0 // loop_footer_branch
    %8 = sbr.rel target = $region3
  $region8: #{discriminator_forward.3} parent=0 // loop_exit
    _

// kernel: discriminator_forward.4
$region0: #{discriminator_forward.4}
  #allocation0 [shape = 'u32[]', space=smem, size = 0x4, offset = 0x4, fixed_abs, tag = 'smem constant byte address 0x4 - core index']
  #allocation1 [shape = 'u32[72,128]{1,0:T(1,128)}', space=vmem, size = 0x9000, scoped, tag = 'internal scratch']
  %s0 = inlined_call_operand.vmem [shape: bf16[2,5,5,256], index: 0, kind: input, shape index: {}]
  %s1 = inlined_call_operand.vmem [shape: bf16[4,256,128], index: 1, kind: input, shape index: {}]
  %s2 = inlined_call_operand.vmem [shape: f32[1,128], index: 2, kind: input, shape index: {}]
  %s3 = inlined_call_operand.vmem [shape: bf16[2,4,4,128], index: 3, kind: output, shape index: {}]
  %s4 = sld [smem:[#allocation0]]
  $region45: #{discriminator_forward.4} parent=0
    _
  %s6 = ssub.s32 1, %s4
  %s7 = scalar_select 0, %s6, %s4
  loop: start=0, step=1, limit=4
  $region2: #{discriminator_forward.4} parent=0 // loop_pre_header
    _
  $region3: #{discriminator_forward.4} parent=0 // loop_header
    %s9 = sphi 0, %s13
    %p10 = scmp.ge.s32.totalorder %s9, 4
    %s16 = sphi 0, %s28
    %s17 = sphi 0, %s24
    %s18 = sphi 0, %s16
    %s19 = sphi 0, %s17
    %s20 = sphi 0, %s18
    %s21 = sphi 0, %s19
    %s31 = sphi 0, %s33
    %s34 = sphi 0, %s31
    %s35 = sphi 0, %s34
    %s51 = sphi 0, %s35
    %s55 = sphi 0, %s55
    %s57 = sphi 0, %s55
    %s58 = sphi 0, %s57
    %s72 = sphi 0, %s58
    %s76 = sphi 0, %s76
    %s78 = sphi 0, %s76
    %s79 = sphi 0, %s78
    %s93 = sphi 0, %s79
    %s101 = sphi 0, %s103
    %s104 = sphi 0, %s101
    %s105 = sphi 0, %s104
    %s121 = sphi 0, %s105
  $region4: #{discriminator_forward.4} parent=0 // loop_header_branch
    %12 = sbr.rel (%p10) target = $region8
  $region5: #{discriminator_forward.4} parent=0 // loop_body
    %s14 = ssub.s32 %s9, 1
    %s15 = ssub.s32 %s9, 2
    %s22 = sadd.s32 1, %s17
    %p23 = scmp.ge.s32.totalorder %s22, 1
    %s24 = scalar_select %p23, 0, %s22
    %s25 = sadd.s32 1, %s16
    %s26 = scalar_select %p23, %s25, %s16
    %p27 = scmp.ge.s32.totalorder %s26, 2
    %s28 = scalar_select %p27, 0, %s26
    %s29 = ssub.s32 %s16, %s28
    %p30 = scmp.eq.s32.totalorder %s29, 0
    %s32 = sadd.s32 %s31, 1
    %s33 = scalar_select %p30, %s31, %s32
    %p36 = pneg %p30
    %p37 = scmp.eq.s32.totalorder %s9, 1
    %p38 = por %p36, %p37
    %p39 = scmp.ne.s32.totalorder %s31, %s34
    %p40 = scmp.eq.s32.totalorder %s9, 0
    %p41 = por %p39, %p40
    %p42 = scmp.ne.s32.totalorder %s31, %s34
    %p43 = scmp.eq.s32.totalorder %s14, 1
    %p44 = por %p42, %p43
    %p45 = scmp.ne.s32.totalorder %s34, %s35
    %p46 = scmp.eq.s32.totalorder %s14, 0
    %p47 = por %p45, %p46
    %p48 = scmp.ne.s32.totalorder %s34, %s35
    %p49 = scmp.eq.s32.totalorder %s15, 1
    %p50 = por %p48, %p49
    %p52 = scmp.ne.s32.totalorder %s35, %s51
    %p53 = scmp.eq.s32.totalorder %s15, 0
    %p54 = por %p52, %p53
    %s56 = sadd.s32 %s55, 1
    %p59 = scmp.eq.s32.totalorder %s9, 1
    %p60 = scmp.ne.s32.totalorder %s55, %s57
    %p61 = scmp.eq.s32.totalorder %s9, 0
    %p62 = por %p60, %p61
    %p63 = scmp.ne.s32.totalorder %s55, %s57
    %p64 = scmp.eq.s32.totalorder %s14, 1
    %p65 = por %p63, %p64
    %p66 = scmp.ne.s32.totalorder %s57, %s58
    %p67 = scmp.eq.s32.totalorder %s14, 0
    %p68 = por %p66, %p67
    %p69 = scmp.ne.s32.totalorder %s57, %s58
    %p70 = scmp.eq.s32.totalorder %s15, 1
    %p71 = por %p69, %p70
    %p73 = scmp.ne.s32.totalorder %s58, %s72
    %p74 = scmp.eq.s32.totalorder %s15, 0
    %p75 = por %p73, %p74
    %s77 = sadd.s32 %s76, 1
    %p80 = scmp.eq.s32.totalorder %s9, 1
    %p81 = scmp.ne.s32.totalorder %s76, %s78
    %p82 = scmp.eq.s32.totalorder %s9, 0
    %p83 = por %p81, %p82
    %p84 = scmp.ne.s32.totalorder %s76, %s78
    %p85 = scmp.eq.s32.totalorder %s14, 1
    %p86 = por %p84, %p85
    %p87 = scmp.ne.s32.totalorder %s78, %s79
    %p88 = scmp.eq.s32.totalorder %s14, 0
    %p89 = por %p87, %p88
    %p90 = scmp.ne.s32.totalorder %s78, %s79
    %p91 = scmp.eq.s32.totalorder %s15, 1
    %p92 = por %p90, %p91
    %p94 = scmp.ne.s32.totalorder %s79, %s93
    %p95 = scmp.eq.s32.totalorder %s15, 0
    %p96 = por %p94, %p95
    %s97 = ssub.s32 %s16, %s28
    %s98 = ssub.s32 %s17, %s24
    %s99 = sor.u32 %s97, %s98
    %p100 = scmp.eq.s32.totalorder %s99, 0
    %s102 = sadd.s32 %s101, 1
    %s103 = scalar_select %p100, %s101, %s102
    %p106 = pneg %p100
    %p107 = scmp.eq.s32.totalorder %s9, 1
    %p108 = por %p106, %p107
    %p109 = scmp.ne.s32.totalorder %s101, %s104
    %p110 = scmp.eq.s32.totalorder %s9, 0
    %p111 = por %p109, %p110
    %p112 = scmp.ne.s32.totalorder %s101, %s104
    %p113 = scmp.eq.s32.totalorder %s14, 1
    %p114 = por %p112, %p113
    %p115 = scmp.ne.s32.totalorder %s104, %s105
    %p116 = scmp.eq.s32.totalorder %s14, 0
    %p117 = por %p115, %p116
    %p118 = scmp.ne.s32.totalorder %s104, %s105
    %p119 = scmp.eq.s32.totalorder %s15, 1
    %p120 = por %p118, %p119
    %p122 = scmp.ne.s32.totalorder %s105, %s121
    %p123 = scmp.eq.s32.totalorder %s15, 0
    %p124 = por %p122, %p123
    %p125 = scmp.le.s32.totalorder 1, %s9
    %p126 = scmp.lt.s32.totalorder %s9, 3
    %p127 = pnand %p125, %p126
    %p128 = pneg %p127
    // Predicated region
    $region9: #{discriminator_forward.4} parent=5 // pred_check
      _
    $region10: #{discriminator_forward.4} parent=5 // pred_check_branch
      %130 = sbr.rel (%p127) target = $region12
    $region11: #{discriminator_forward.4} parent=5 // pred_region
      %s131 = ssub.s32 %s9, 1
      // Predicated region
      $region13: #{discriminator_forward.4} parent=11 // pred_check
        %p132 = pneg %p68
      $region14: #{discriminator_forward.4} parent=11 // pred_check_branch
        %134 = sbr.rel (%p132) target = $region16
      $region15: #{discriminator_forward.4} parent=11 // pred_region
        _
      $region16: #{discriminator_forward.4} parent=11 // pred_fallthru
        _
      // Predicated region
      $region17: #{discriminator_forward.4} parent=11 // pred_check
        %p135 = pneg %p89
      $region18: #{discriminator_forward.4} parent=11 // pred_check_branch
        %137 = sbr.rel (%p135) target = $region20
      $region19: #{discriminator_forward.4} parent=11 // pred_region
        _
      $region20: #{discriminator_forward.4} parent=11 // pred_fallthru
        _
    $region12: #{discriminator_forward.4} parent=5 // pred_fallthru
      _
    %p138 = scmp.lt.s32.totalorder %s9, 2
    // Predicated region
    $region21: #{discriminator_forward.4} parent=5 // pred_check
      %p139 = pneg %p138
    $region22: #{discriminator_forward.4} parent=5 // pred_check_branch
      %141 = sbr.rel (%p139) target = $region24
    $region23: #{discriminator_forward.4} parent=5 // pred_region
      // Predicated region
      $region25: #{discriminator_forward.4} parent=23 // pred_check
        %p142 = pneg %p41
      $region26: #{discriminator_forward.4} parent=23 // pred_check_branch
        %144 = sbr.rel (%p142) target = $region28
      $region27: #{discriminator_forward.4} parent=23 // pred_region
        %p145 = scmp.lt.s32.totalorder %s16, 1
        %s146 = scalar_select %p145, %s16, 1
        %s147 = smul.addr %s146, 10
        %s148 = smul.addr %s147, 4
        %s149 = scalar_lea.vmem %s0, %s148
      $region28: #{discriminator_forward.4} parent=23 // pred_fallthru
        _
    $region24: #{discriminator_forward.4} parent=5 // pred_fallthru
      _
    %p150 = scmp.le.s32.totalorder 1, %s9
    %p151 = scmp.lt.s32.totalorder %s9, 3
    %p152 = pnand %p150, %p151
    %p153 = pneg %p152
    // Predicated region
    $region29: #{discriminator_forward.4} parent=5 // pred_check
      _
    $region30: #{discriminator_forward.4} parent=5 // pred_check_branch
      %155 = sbr.rel (%p152) target = $region32
    $region31: #{discriminator_forward.4} parent=5 // pred_region
      %s156 = ssub.s32 %s9, 1
      %p157 = scmp.lt.s32.totalorder %s18, 1
      %s158 = scalar_select %p157, %s18, 1
      %s159 = smul.addr %s158, 10
      %s160 = smul.addr %s159, 4
      %s161 = scalar_lea.vmem %s0, %s160
      %p162 = pneg %p47
      %p163 = pneg %p44
      %p164 = pneg %p68
      %p165 = pneg %p65
      %p166 = pneg %p89
      %p167 = pneg %p86
      %p168 = pneg %p117
      %p169 = pneg %p114
      %s170 = smul.u32 4, %s19
      %p171 = scmp.lt.s32.totalorder %s18, 1
      %s172 = scalar_select %p171, %s18, 1
      %p173 = scmp.lt.s32.totalorder %s170, 3
      %s174 = scalar_select %p173, %s170, 3
      %s175 = smul.addr %s172, 4
      %s176 = sadd.s32 %s174, %s175
      %s177 = smul.addr %s176, 2
      %s178 = scalar_lea.vmem %s3, %s177
      %p179 = scmp.lt.s32.totalorder %s18, 1
      %s180 = scalar_select %p179, %s18, 1
      %s181 = smul.addr %s180, 10
      %s182 = smul.addr %s181, 4
      %s183 = scalar_lea.vmem %s0, %s182
      %s184 = smul.u32 4, %s19
      %p185 = scmp.lt.s32.totalorder %s18, 1
      %s186 = scalar_select %p185, %s18, 1
      %p187 = scmp.lt.s32.totalorder %s184, 3
      %s188 = scalar_select %p187, %s184, 3
      %s189 = smul.addr %s186, 4
      %s190 = sadd.s32 %s188, %s189
      %s191 = smul.addr %s190, 2
      %s192 = scalar_lea.vmem %s3, %s191
      %s193 = smul.u32 4, %s19
      %s194 = smul.u32 %s19, 4
      %s195 = smul.u32 %s194, 2
      %s196 = smul.addr %s195, 4
      %s197 = scalar_lea.vmem %s183, %s196
      %v198 = vld [vmem:[%s197] sm:$0x33]
      %v199 = vld [vmem:[%s197 + $0x8] sm:$0x33]
      %v200 = vld [vmem:[%s197 + $0x10] sm:$0x33]
      %v201 = vld [vmem:[%s197 + $0x18] sm:$0x33]
      %v206 = vrot.slane %v198, 2
      %v207 = vrot.slane %v199, 2
      %v208 = vrot.slane %v200, 2
      %v209 = vrot.slane %v201, 2
      %vm210 = vcmask 1041408
      %v213 = vsel %vm210, %v198, %v206
      %v216 = vsel %vm210, %v199, %v207
      %v219 = vsel %vm210, %v200, %v208
      %v222 = vsel %vm210, %v201, %v209
      %v223 = vld [vmem:[%s1] sm:$0xf]
      %v224 = vld [vmem:[%s1 + $0x4] sm:$0xf]
      %v225 = vld [vmem:[%s1 + $0x8] sm:$0xf]
      %v226 = vld [vmem:[%s1 + $0xc] sm:$0xf]
      %v227 = vld [vmem:[%s1 + $0x10] sm:$0xf]
      %v228 = vld [vmem:[%s1 + $0x14] sm:$0xf]
      %v229 = vld [vmem:[%s1 + $0x18] sm:$0xf]
      %v230 = vld [vmem:[%s1 + $0x1c] sm:$0xf]
      %v231 = vld [vmem:[%s1 + $0x20] sm:$0xf]
      %v232 = vld [vmem:[%s1 + $0x24] sm:$0xf]
      %v233 = vld [vmem:[%s1 + $0x28] sm:$0xf]
      %v234 = vld [vmem:[%s1 + $0x2c] sm:$0xf]
      %v235 = vld [vmem:[%s1 + $0x30] sm:$0xf]
      %v236 = vld [vmem:[%s1 + $0x34] sm:$0xf]
      %v237 = vld [vmem:[%s1 + $0x38] sm:$0xf]
      %v238 = vld [vmem:[%s1 + $0x3c] sm:$0xf]
      %v239 = vld [vmem:[%s1 + $0x40] sm:$0xf]
      %v240 = vld [vmem:[%s1 + $0x44] sm:$0xf]
      %v241 = vld [vmem:[%s1 + $0x48] sm:$0xf]
      %v242 = vld [vmem:[%s1 + $0x4c] sm:$0xf]
      %v243 = vld [vmem:[%s1 + $0x50] sm:$0xf]
      %v244 = vld [vmem:[%s1 + $0x54] sm:$0xf]
      %v245 = vld [vmem:[%s1 + $0x58] sm:$0xf]
      %v246 = vld [vmem:[%s1 + $0x5c] sm:$0xf]
      %v247 = vld [vmem:[%s1 + $0x60] sm:$0xf]
      %v248 = vld [vmem:[%s1 + $0x64] sm:$0xf]
      %v249 = vld [vmem:[%s1 + $0x68] sm:$0xf]
      %v250 = vld [vmem:[%s1 + $0x6c] sm:$0xf]
      %v251 = vld [vmem:[%s1 + $0x70] sm:$0xf]
      %v252 = vld [vmem:[%s1 + $0x74] sm:$0xf]
      %v253 = vld [vmem:[%s1 + $0x78] sm:$0xf]
      %v254 = vld [vmem:[%s1 + $0x7c] sm:$0xf]
      %v255 = vld [vmem:[%s197] sm:$0x77]
      %v256 = vld [vmem:[%s197 + $0x8] sm:$0x77]
      %v257 = vld [vmem:[%s197 + $0x10] sm:$0x77]
      %v258 = vld [vmem:[%s197 + $0x18] sm:$0x77]
      %v263 = vrot.slane %v255, 2
      %v264 = vrot.slane %v256, 2
      %v265 = vrot.slane %v257, 2
      %v266 = vrot.slane %v258, 2
      %v269 = vsel %vm210, %v255, %v263
      %vm270 = vcmask 1043458
      %v271 = vsel %vm270, %v255, %v263
      %v273 = vrot.slane %v271, 2
      %v276 = vsel %vm210, %v256, %v264
      %v277 = vsel %vm270, %v256, %v264
      %v279 = vrot.slane %v277, 2
      %v282 = vsel %vm210, %v257, %v265
      %v283 = vsel %vm270, %v257, %v265
      %v285 = vrot.slane %v283, 2
      %v288 = vsel %vm210, %v258, %v266
      %v289 = vsel %vm270, %v258, %v266
      %v291 = vrot.slane %v289, 2
      %vm292 = vsmask.f32 1280
      %vm293 = vsmask.f32 3336
      %vm294 = vmor %vm292, %vm293
      %vm295 = vsmask.f32 5392
      %vm296 = vmor %vm294, %vm295
      %vm297 = vsmask.f32 7448
      %vm298 = vmor %vm296, %vm297
      %v299 = vshrl.u32 %v269, 16
      %v301 = vrot.slane %v299, 6
      %v302 = vshll.u32 %v269, 16
      %v304 = vrot.slane %v302, 7
      %v305 = vor.u32 %v301, %v304
      %v306 = vrot.slane %v305, 2
      %v308 = vshll.u32 %v273, 16
      %v310 = vrot.slane %v308, 7
      %v311 = vsel %vm298, %v306, %v310
      %v312 = vshrl.u32 %v276, 16
      %v314 = vrot.slane %v312, 6
      %v315 = vshll.u32 %v276, 16
      %v317 = vrot.slane %v315, 7
      %v318 = vor.u32 %v314, %v317
      %v319 = vrot.slane %v318, 2
      %v321 = vshll.u32 %v279, 16
      %v323 = vrot.slane %v321, 7
      %v324 = vsel %vm298, %v319, %v323
      %v325 = vshrl.u32 %v282, 16
      %v327 = vrot.slane %v325, 6
      %v328 = vshll.u32 %v282, 16
      %v330 = vrot.slane %v328, 7
      %v331 = vor.u32 %v327, %v330
      %v332 = vrot.slane %v331, 2
      %v334 = vshll.u32 %v285, 16
      %v336 = vrot.slane %v334, 7
      %v337 = vsel %vm298, %v332, %v336
      %v338 = vshrl.u32 %v288, 16
      %v340 = vrot.slane %v338, 6
      %v341 = vshll.u32 %v288, 16
      %v343 = vrot.slane %v341, 7
      %v344 = vor.u32 %v340, %v343
      %v345 = vrot.slane %v344, 2
      %v347 = vshll.u32 %v291, 16
      %v349 = vrot.slane %v347, 7
      %v350 = vsel %vm298, %v345, %v349
      %s351 = scalar_lea.vmem %s1, 128
      %v352 = vld [vmem:[%s351] sm:$0xf]
      %v353 = vld [vmem:[%s351 + $0x4] sm:$0xf]
      %v354 = vld [vmem:[%s351 + $0x8] sm:$0xf]
      %v355 = vld [vmem:[%s351 + $0xc] sm:$0xf]
      %v356 = vld [vmem:[%s351 + $0x10] sm:$0xf]
      %v357 = vld [vmem:[%s351 + $0x14] sm:$0xf]
      %v358 = vld [vmem:[%s351 + $0x18] sm:$0xf]
      %v359 = vld [vmem:[%s351 + $0x1c] sm:$0xf]
      %v360 = vld [vmem:[%s351 + $0x20] sm:$0xf]
      %v361 = vld [vmem:[%s351 + $0x24] sm:$0xf]
      %v362 = vld [vmem:[%s351 + $0x28] sm:$0xf]
      %v363 = vld [vmem:[%s351 + $0x2c] sm:$0xf]
      %v364 = vld [vmem:[%s351 + $0x30] sm:$0xf]
      %v365 = vld [vmem:[%s351 + $0x34] sm:$0xf]
      %v366 = vld [vmem:[%s351 + $0x38] sm:$0xf]
      %v367 = vld [vmem:[%s351 + $0x3c] sm:$0xf]
      %v368 = vld [vmem:[%s351 + $0x40] sm:$0xf]
      %v369 = vld [vmem:[%s351 + $0x44] sm:$0xf]
      %v370 = vld [vmem:[%s351 + $0x48] sm:$0xf]
      %v371 = vld [vmem:[%s351 + $0x4c] sm:$0xf]
      %v372 = vld [vmem:[%s351 + $0x50] sm:$0xf]
      %v373 = vld [vmem:[%s351 + $0x54] sm:$0xf]
      %v374 = vld [vmem:[%s351 + $0x58] sm:$0xf]
      %v375 = vld [vmem:[%s351 + $0x5c] sm:$0xf]
      %v376 = vld [vmem:[%s351 + $0x60] sm:$0xf]
      %v377 = vld [vmem:[%s351 + $0x64] sm:$0xf]
      %v378 = vld [vmem:[%s351 + $0x68] sm:$0xf]
      %v379 = vld [vmem:[%s351 + $0x6c] sm:$0xf]
      %v380 = vld [vmem:[%s351 + $0x70] sm:$0xf]
      %v381 = vld [vmem:[%s351 + $0x74] sm:$0xf]
      %v382 = vld [vmem:[%s351 + $0x78] sm:$0xf]
      %v383 = vld [vmem:[%s351 + $0x7c] sm:$0xf]
      %385 = vst [vmem:[#allocation1] ss:$4 sm:$0xff] %v311
      %s387 = scalar_lea.vmem [#allocation1], 1
      %388 = vst [vmem:[%s387] ss:$4 sm:$0xff] %v324
      %s390 = scalar_lea.vmem [#allocation1], 2
      %391 = vst [vmem:[%s390] ss:$4 sm:$0xff] %v337
      %s393 = scalar_lea.vmem [#allocation1], 3
      %394 = vst [vmem:[%s393] ss:$4 sm:$0xff] %v350
      %v395 = vld.sshfl [vmem:[#allocation1] sm:$0xff pattern:$0x73625140]
      %v396 = vld.sshfl [vmem:[#allocation1 + $0x8] sm:$0xff pattern:$0x73625140]
      %v431 = vunpack.c.l.b16 %v352
      %v432 = vunpack.c.l.b16 %v353
      %v433 = vunpack.c.l.b16 %v354
      %v434 = vunpack.c.l.b16 %v355
      %v435 = vunpack.c.l.b16 %v356
      %v436 = vunpack.c.l.b16 %v357
      %v437 = vunpack.c.l.b16 %v358
      %v438 = vunpack.c.l.b16 %v359
      %v439 = vunpack.c.l.b16 %v360
      %v440 = vunpack.c.l.b16 %v361
      %v441 = vunpack.c.l.b16 %v362
      %v442 = vunpack.c.l.b16 %v363
      %v443 = vunpack.c.l.b16 %v364
      %v444 = vunpack.c.l.b16 %v365
      %v445 = vunpack.c.l.b16 %v366
      %v446 = vunpack.c.l.b16 %v367
      %v447 = vunpack.c.l.b16 %v368
      %v448 = vunpack.c.l.b16 %v369
      %v449 = vunpack.c.l.b16 %v370
      %v450 = vunpack.c.l.b16 %v371
      %v451 = vunpack.c.l.b16 %v372
      %v452 = vunpack.c.l.b16 %v373
      %v453 = vunpack.c.l.b16 %v374
      %v454 = vunpack.c.l.b16 %v375
      %v455 = vunpack.c.l.b16 %v376
      %v456 = vunpack.c.l.b16 %v377
      %v457 = vunpack.c.l.b16 %v378
      %v458 = vunpack.c.l.b16 %v379
      %v459 = vunpack.c.l.b16 %v380
      %v460 = vunpack.c.l.b16 %v381
      %v461 = vunpack.c.l.b16 %v382
      %v462 = vunpack.c.l.b16 %v383
      %v463 = vpack.c.b16 %v432, %v431
      %v464 = vpack.c.b16 %v434, %v433
      %v465 = vpack.c.b16 %v436, %v435
      %v466 = vpack.c.b16 %v438, %v437
      %v467 = vpack.c.b16 %v440, %v439
      %v468 = vpack.c.b16 %v442, %v441
      %v469 = vpack.c.b16 %v444, %v443
      %v470 = vpack.c.b16 %v446, %v445
      %v471 = vpack.c.b16 %v448, %v447
      %v472 = vpack.c.b16 %v450, %v449
      %v473 = vpack.c.b16 %v452, %v451
      %v474 = vpack.c.b16 %v454, %v453
      %v475 = vpack.c.b16 %v456, %v455
      %v476 = vpack.c.b16 %v458, %v457
      %v477 = vpack.c.b16 %v460, %v459
      %v478 = vpack.c.b16 %v462, %v461
      %495 = vmatpush.bf16.msra.mxu0 %v470
      %496 = vmatpush.bf16.msra.mxu0 %v469
      %497 = vmatpush.bf16.msra.mxu0 %v468
      %498 = vmatpush.bf16.msra.mxu0 %v467
      %499 = vmatpush.bf16.msra.mxu0 %v466
      %500 = vmatpush.bf16.msra.mxu0 %v465
      %501 = vmatpush.bf16.msra.mxu0 %v464
      %502 = vmatpush.bf16.msra.mxu0 %v463
      %503 = vmatmul.bf16.gmra.mxu0 %v395
      %v504 = vpop.f32.mrf.mxu0
      %v505 = vadd.f32 0.0, %v504
      %v506 = vpop.f32.mrf.mxu0
      %v507 = vadd.f32 0.0, %v506
      %508 = vdwg.mxu0
      %509 = vmatpush.bf16.msra.mxu0 %v478
      %510 = vmatpush.bf16.msra.mxu0 %v477
      %511 = vmatpush.bf16.msra.mxu0 %v476
      %512 = vmatpush.bf16.msra.mxu0 %v475
      %513 = vmatpush.bf16.msra.mxu0 %v474
      %514 = vmatpush.bf16.msra.mxu0 %v473
      %515 = vmatpush.bf16.msra.mxu0 %v472
      %516 = vmatpush.bf16.msra.mxu0 %v471
      %517 = vmatmul.bf16.gmra.mxu0 %v396
      %v518 = vpop.f32.mrf.mxu0
      %v519 = vadd.f32 %v505, %v518
      %v520 = vpop.f32.mrf.mxu0
      %v521 = vadd.f32 %v507, %v520
      %522 = vdwg.mxu0
      %523 = vst [vmem:[#allocation1] ss:$4 sm:$0xff] %v213
      %s524 = scalar_lea.vmem [#allocation1], 1
      %525 = vst [vmem:[%s524] ss:$4 sm:$0xff] %v216
      %s526 = scalar_lea.vmem [#allocation1], 2
      %527 = vst [vmem:[%s526] ss:$4 sm:$0xff] %v219
      %s528 = scalar_lea.vmem [#allocation1], 3
      %529 = vst [vmem:[%s528] ss:$4 sm:$0xff] %v222
      %v530 = vld.sshfl [vmem:[#allocation1] sm:$0xff pattern:$0x73625140]
      %v531 = vld.sshfl [vmem:[#allocation1 + $0x8] sm:$0xff pattern:$0x73625140]
      %v566 = vunpack.c.l.b16 %v223
      %v567 = vunpack.c.l.b16 %v224
      %v568 = vunpack.c.l.b16 %v225
      %v569 = vunpack.c.l.b16 %v226
      %v570 = vunpack.c.l.b16 %v227
      %v571 = vunpack.c.l.b16 %v228
      %v572 = vunpack.c.l.b16 %v229
      %v573 = vunpack.c.l.b16 %v230
      %v574 = vunpack.c.l.b16 %v231
      %v575 = vunpack.c.l.b16 %v232
      %v576 = vunpack.c.l.b16 %v233
      %v577 = vunpack.c.l.b16 %v234
      %v578 = vunpack.c.l.b16 %v235
      %v579 = vunpack.c.l.b16 %v236
      %v580 = vunpack.c.l.b16 %v237
      %v581 = vunpack.c.l.b16 %v238
      %v582 = vunpack.c.l.b16 %v239
      %v583 = vunpack.c.l.b16 %v240
      %v584 = vunpack.c.l.b16 %v241
      %v585 = vunpack.c.l.b16 %v242
      %v586 = vunpack.c.l.b16 %v243
      %v587 = vunpack.c.l.b16 %v244
      %v588 = vunpack.c.l.b16 %v245
      %v589 = vunpack.c.l.b16 %v246
      %v590 = vunpack.c.l.b16 %v247
      %v591 = vunpack.c.l.b16 %v248
      %v592 = vunpack.c.l.b16 %v249
      %v593 = vunpack.c.l.b16 %v250
      %v594 = vunpack.c.l.b16 %v251
      %v595 = vunpack.c.l.b16 %v252
      %v596 = vunpack.c.l.b16 %v253
      %v597 = vunpack.c.l.b16 %v254
      %v598 = vpack.c.b16 %v567, %v566
      %v599 = vpack.c.b16 %v569, %v568
      %v600 = vpack.c.b16 %v571, %v570
      %v601 = vpack.c.b16 %v573, %v572
      %v602 = vpack.c.b16 %v575, %v574
      %v603 = vpack.c.b16 %v577, %v576
      %v604 = vpack.c.b16 %v579, %v578
      %v605 = vpack.c.b16 %v581, %v580
      %v606 = vpack.c.b16 %v583, %v582
      %v607 = vpack.c.b16 %v585, %v584
      %v608 = vpack.c.b16 %v587, %v586
      %v609 = vpack.c.b16 %v589, %v588
      %v610 = vpack.c.b16 %v591, %v590
      %v611 = vpack.c.b16 %v593, %v592
      %v612 = vpack.c.b16 %v595, %v594
      %v613 = vpack.c.b16 %v597, %v596
      %630 = vmatpush.bf16.msra.mxu0 %v605
      %631 = vmatpush.bf16.msra.mxu0 %v604
      %632 = vmatpush.bf16.msra.mxu0 %v603
      %633 = vmatpush.bf16.msra.mxu0 %v602
      %634 = vmatpush.bf16.msra.mxu0 %v601
      %635 = vmatpush.bf16.msra.mxu0 %v600
      %636 = vmatpush.bf16.msra.mxu0 %v599
      %637 = vmatpush.bf16.msra.mxu0 %v598
      %638 = vmatmul.bf16.gmra.mxu0 %v530
      %v639 = vpop.f32.mrf.mxu0
      %v640 = vadd.f32 %v519, %v639
      %v641 = vpop.f32.mrf.mxu0
      %v642 = vadd.f32 %v521, %v641
      %643 = vdwg.mxu0
      %644 = vmatpush.bf16.msra.mxu0 %v613
      %645 = vmatpush.bf16.msra.mxu0 %v612
      %646 = vmatpush.bf16.msra.mxu0 %v611
      %647 = vmatpush.bf16.msra.mxu0 %v610
      %648 = vmatpush.bf16.msra.mxu0 %v609
      %649 = vmatpush.bf16.msra.mxu0 %v608
      %650 = vmatpush.bf16.msra.mxu0 %v607
      %651 = vmatpush.bf16.msra.mxu0 %v606
      %652 = vmatmul.bf16.gmra.mxu0 %v531
      %v653 = vpop.f32.mrf.mxu0
      %v654 = vadd.f32 %v640, %v653
      %v655 = vpop.f32.mrf.mxu0
      %v656 = vadd.f32 %v642, %v655
      %657 = vdwg.mxu0
      %s658 = sadd.s32 %s194, 1
      %s659 = smul.u32 %s658, 2
      %s660 = smul.addr %s659, 4
      %s661 = scalar_lea.vmem %s183, %s660
      %v662 = vld [vmem:[%s661] sm:$0x33]
      %v663 = vld [vmem:[%s661 + $0x8] sm:$0x33]
      %v664 = vld [vmem:[%s661 + $0x10] sm:$0x33]
      %v665 = vld [vmem:[%s661 + $0x18] sm:$0x33]
      %v670 = vrot.slane %v662, 2
      %v671 = vrot.slane %v663, 2
      %v672 = vrot.slane %v664, 2
      %v673 = vrot.slane %v665, 2
      %v676 = vsel %vm210, %v662, %v670
      %v679 = vsel %vm210, %v663, %v671
      %v682 = vsel %vm210, %v664, %v672
      %v685 = vsel %vm210, %v665, %v673
      %s686 = scalar_lea.vmem %s1, 256
      %v687 = vld [vmem:[%s686] sm:$0xf]
      %v688 = vld [vmem:[%s686 + $0x4] sm:$0xf]
      %v689 = vld [vmem:[%s686 + $0x8] sm:$0xf]
      %v690 = vld [vmem:[%s686 + $0xc] sm:$0xf]
      %v691 = vld [vmem:[%s686 + $0x10] sm:$0xf]
      %v692 = vld [vmem:[%s686 + $0x14] sm:$0xf]
      %v693 = vld [vmem:[%s686 + $0x18] sm:$0xf]
      %v694 = vld [vmem:[%s686 + $0x1c] sm:$0xf]
      %v695 = vld [vmem:[%s686 + $0x20] sm:$0xf]
      %v696 = vld [vmem:[%s686 + $0x24] sm:$0xf]
      %v697 = vld [vmem:[%s686 + $0x28] sm:$0xf]
      %v698 = vld [vmem:[%s686 + $0x2c] sm:$0xf]
      %v699 = vld [vmem:[%s686 + $0x30] sm:$0xf]
      %v700 = vld [vmem:[%s686 + $0x34] sm:$0xf]
      %v701 = vld [vmem:[%s686 + $0x38] sm:$0xf]
      %v702 = vld [vmem:[%s686 + $0x3c] sm:$0xf]
      %v703 = vld [vmem:[%s686 + $0x40] sm:$0xf]
      %v704 = vld [vmem:[%s686 + $0x44] sm:$0xf]
      %v705 = vld [vmem:[%s686 + $0x48] sm:$0xf]
      %v706 = vld [vmem:[%s686 + $0x4c] sm:$0xf]
      %v707 = vld [vmem:[%s686 + $0x50] sm:$0xf]
      %v708 = vld [vmem:[%s686 + $0x54] sm:$0xf]
      %v709 = vld [vmem:[%s686 + $0x58] sm:$0xf]
      %v710 = vld [vmem:[%s686 + $0x5c] sm:$0xf]
      %v711 = vld [vmem:[%s686 + $0x60] sm:$0xf]
      %v712 = vld [vmem:[%s686 + $0x64] sm:$0xf]
      %v713 = vld [vmem:[%s686 + $0x68] sm:$0xf]
      %v714 = vld [vmem:[%s686 + $0x6c] sm:$0xf]
      %v715 = vld [vmem:[%s686 + $0x70] sm:$0xf]
      %v716 = vld [vmem:[%s686 + $0x74] sm:$0xf]
      %v717 = vld [vmem:[%s686 + $0x78] sm:$0xf]
      %v718 = vld [vmem:[%s686 + $0x7c] sm:$0xf]
      %719 = vst [vmem:[#allocation1] ss:$4 sm:$0xff] %v676
      %s720 = scalar_lea.vmem [#allocation1], 1
      %721 = vst [vmem:[%s720] ss:$4 sm:$0xff] %v679
      %s722 = scalar_lea.vmem [#allocation1], 2
      %723 = vst [vmem:[%s722] ss:$4 sm:$0xff] %v682
      %s724 = scalar_lea.vmem [#allocation1], 3
      %725 = vst [vmem:[%s724] ss:$4 sm:$0xff] %v685
      %v726 = vld.sshfl [vmem:[#allocation1] sm:$0xff pattern:$0x73625140]
      %v727 = vld.sshfl [vmem:[#allocation1 + $0x8] sm:$0xff pattern:$0x73625140]
      %v762 = vunpack.c.l.b16 %v687
      %v763 = vunpack.c.l.b16 %v688
      %v764 = vunpack.c.l.b16 %v689
      %v765 = vunpack.c.l.b16 %v690
      %v766 = vunpack.c.l.b16 %v691
      %v767 = vunpack.c.l.b16 %v692
      %v768 = vunpack.c.l.b16 %v693
      %v769 = vunpack.c.l.b16 %v694
      %v770 = vunpack.c.l.b16 %v695
      %v771 = vunpack.c.l.b16 %v696
      %v772 = vunpack.c.l.b16 %v697
      %v773 = vunpack.c.l.b16 %v698
      %v774 = vunpack.c.l.b16 %v699
      %v775 = vunpack.c.l.b16 %v700
      %v776 = vunpack.c.l.b16 %v701
      %v777 = vunpack.c.l.b16 %v702
      %v778 = vunpack.c.l.b16 %v703
      %v779 = vunpack.c.l.b16 %v704
      %v780 = vunpack.c.l.b16 %v705
      %v781 = vunpack.c.l.b16 %v706
      %v782 = vunpack.c.l.b16 %v707
      %v783 = vunpack.c.l.b16 %v708
      %v784 = vunpack.c.l.b16 %v709
      %v785 = vunpack.c.l.b16 %v710
      %v786 = vunpack.c.l.b16 %v711
      %v787 = vunpack.c.l.b16 %v712
      %v788 = vunpack.c.l.b16 %v713
      %v789 = vunpack.c.l.b16 %v714
      %v790 = vunpack.c.l.b16 %v715
      %v791 = vunpack.c.l.b16 %v716
      %v792 = vunpack.c.l.b16 %v717
      %v793 = vunpack.c.l.b16 %v718
      %v794 = vpack.c.b16 %v763, %v762
      %v795 = vpack.c.b16 %v765, %v764
      %v796 = vpack.c.b16 %v767, %v766
      %v797 = vpack.c.b16 %v769, %v768
      %v798 = vpack.c.b16 %v771, %v770
      %v799 = vpack.c.b16 %v773, %v772
      %v800 = vpack.c.b16 %v775, %v774
      %v801 = vpack.c.b16 %v777, %v776
      %v802 = vpack.c.b16 %v779, %v778
      %v803 = vpack.c.b16 %v781, %v780
      %v804 = vpack.c.b16 %v783, %v782
      %v805 = vpack.c.b16 %v785, %v784
      %v806 = vpack.c.b16 %v787, %v786
      %v807 = vpack.c.b16 %v789, %v788
      %v808 = vpack.c.b16 %v791, %v790
      %v809 = vpack.c.b16 %v793, %v792
      %826 = vmatpush.bf16.msra.mxu0 %v801
      %827 = vmatpush.bf16.msra.mxu0 %v800
      %828 = vmatpush.bf16.msra.mxu0 %v799
      %829 = vmatpush.bf16.msra.mxu0 %v798
      %830 = vmatpush.bf16.msra.mxu0 %v797
      %831 = vmatpush.bf16.msra.mxu0 %v796
      %832 = vmatpush.bf16.msra.mxu0 %v795
      %833 = vmatpush.bf16.msra.mxu0 %v794
      %834 = vmatmul.bf16.gmra.mxu0 %v726
      %v835 = vpop.f32.mrf.mxu0
      %v836 = vadd.f32 0.0, %v835
      %v837 = vpop.f32.mrf.mxu0
      %v838 = vadd.f32 0.0, %v837
      %839 = vdwg.mxu0
      %840 = vmatpush.bf16.msra.mxu0 %v809
      %841 = vmatpush.bf16.msra.mxu0 %v808
      %842 = vmatpush.bf16.msra.mxu0 %v807
      %843 = vmatpush.bf16.msra.mxu0 %v806
      %844 = vmatpush.bf16.msra.mxu0 %v805
      %845 = vmatpush.bf16.msra.mxu0 %v804
      %846 = vmatpush.bf16.msra.mxu0 %v803
      %847 = vmatpush.bf16.msra.mxu0 %v802
      %848 = vmatmul.bf16.gmra.mxu0 %v727
      %v849 = vpop.f32.mrf.mxu0
      %v850 = vadd.f32 %v836, %v849
      %v851 = vpop.f32.mrf.mxu0
      %v852 = vadd.f32 %v838, %v851
      %853 = vdwg.mxu0
      %v854 = vadd.f32 %v654, %v850
      %v855 = vadd.f32 %v656, %v852
      %v856 = vld [vmem:[%s661] sm:$0x77]
      %v857 = vld [vmem:[%s661 + $0x8] sm:$0x77]
      %v858 = vld [vmem:[%s661 + $0x10] sm:$0x77]
      %v859 = vld [vmem:[%s661 + $0x18] sm:$0x77]
      %v864 = vrot.slane %v856, 2
      %v865 = vrot.slane %v857, 2
      %v866 = vrot.slane %v858, 2
      %v867 = vrot.slane %v859, 2
      %v870 = vsel %vm210, %v856, %v864
      %v871 = vsel %vm270, %v856, %v864
      %v873 = vrot.slane %v871, 2
      %v876 = vsel %vm210, %v857, %v865
      %v877 = vsel %vm270, %v857, %v865
      %v879 = vrot.slane %v877, 2
      %v882 = vsel %vm210, %v858, %v866
      %v883 = vsel %vm270, %v858, %v866
      %v885 = vrot.slane %v883, 2
      %v888 = vsel %vm210, %v859, %v867
      %v889 = vsel %vm270, %v859, %v867
      %v891 = vrot.slane %v889, 2
      %v892 = vshrl.u32 %v870, 16
      %v894 = vrot.slane %v892, 6
      %v895 = vshll.u32 %v870, 16
      %v897 = vrot.slane %v895, 7
      %v898 = vor.u32 %v894, %v897
      %v899 = vrot.slane %v898, 2
      %v901 = vshll.u32 %v873, 16
      %v903 = vrot.slane %v901, 7
      %v904 = vsel %vm298, %v899, %v903
      %v905 = vshrl.u32 %v876, 16
      %v907 = vrot.slane %v905, 6
      %v908 = vshll.u32 %v876, 16
      %v910 = vrot.slane %v908, 7
      %v911 = vor.u32 %v907, %v910
      %v912 = vrot.slane %v911, 2
      %v914 = vshll.u32 %v879, 16
      %v916 = vrot.slane %v914, 7
      %v917 = vsel %vm298, %v912, %v916
      %v918 = vshrl.u32 %v882, 16
      %v920 = vrot.slane %v918, 6
      %v921 = vshll.u32 %v882, 16
      %v923 = vrot.slane %v921, 7
      %v924 = vor.u32 %v920, %v923
      %v925 = vrot.slane %v924, 2
      %v927 = vshll.u32 %v885, 16
      %v929 = vrot.slane %v927, 7
      %v930 = vsel %vm298, %v925, %v929
      %v931 = vshrl.u32 %v888, 16
      %v933 = vrot.slane %v931, 6
      %v934 = vshll.u32 %v888, 16
      %v936 = vrot.slane %v934, 7
      %v937 = vor.u32 %v933, %v936
      %v938 = vrot.slane %v937, 2
      %v940 = vshll.u32 %v891, 16
      %v942 = vrot.slane %v940, 7
      %v943 = vsel %vm298, %v938, %v942
      %s944 = scalar_lea.vmem %s1, 384
      %v945 = vld [vmem:[%s944] sm:$0xf]
      %v946 = vld [vmem:[%s944 + $0x4] sm:$0xf]
      %v947 = vld [vmem:[%s944 + $0x8] sm:$0xf]
      %v948 = vld [vmem:[%s944 + $0xc] sm:$0xf]
      %v949 = vld [vmem:[%s944 + $0x10] sm:$0xf]
      %v950 = vld [vmem:[%s944 + $0x14] sm:$0xf]
      %v951 = vld [vmem:[%s944 + $0x18] sm:$0xf]
      %v952 = vld [vmem:[%s944 + $0x1c] sm:$0xf]
      %v953 = vld [vmem:[%s944 + $0x20] sm:$0xf]
      %v954 = vld [vmem:[%s944 + $0x24] sm:$0xf]
      %v955 = vld [vmem:[%s944 + $0x28] sm:$0xf]
      %v956 = vld [vmem:[%s944 + $0x2c] sm:$0xf]
      %v957 = vld [vmem:[%s944 + $0x30] sm:$0xf]
      %v958 = vld [vmem:[%s944 + $0x34] sm:$0xf]
      %v959 = vld [vmem:[%s944 + $0x38] sm:$0xf]
      %v960 = vld [vmem:[%s944 + $0x3c] sm:$0xf]
      %v961 = vld [vmem:[%s944 + $0x40] sm:$0xf]
      %v962 = vld [vmem:[%s944 + $0x44] sm:$0xf]
      %v963 = vld [vmem:[%s944 + $0x48] sm:$0xf]
      %v964 = vld [vmem:[%s944 + $0x4c] sm:$0xf]
      %v965 = vld [vmem:[%s944 + $0x50] sm:$0xf]
      %v966 = vld [vmem:[%s944 + $0x54] sm:$0xf]
      %v967 = vld [vmem:[%s944 + $0x58] sm:$0xf]
      %v968 = vld [vmem:[%s944 + $0x5c] sm:$0xf]
      %v969 = vld [vmem:[%s944 + $0x60] sm:$0xf]
      %v970 = vld [vmem:[%s944 + $0x64] sm:$0xf]
      %v971 = vld [vmem:[%s944 + $0x68] sm:$0xf]
      %v972 = vld [vmem:[%s944 + $0x6c] sm:$0xf]
      %v973 = vld [vmem:[%s944 + $0x70] sm:$0xf]
      %v974 = vld [vmem:[%s944 + $0x74] sm:$0xf]
      %v975 = vld [vmem:[%s944 + $0x78] sm:$0xf]
      %v976 = vld [vmem:[%s944 + $0x7c] sm:$0xf]
      %978 = vst [vmem:[#allocation1] ss:$4 sm:$0xff] %v904
      %s980 = scalar_lea.vmem [#allocation1], 1
      %981 = vst [vmem:[%s980] ss:$4 sm:$0xff] %v917
      %s983 = scalar_lea.vmem [#allocation1], 2
      %984 = vst [vmem:[%s983] ss:$4 sm:$0xff] %v930
      %s986 = scalar_lea.vmem [#allocation1], 3
      %987 = vst [vmem:[%s986] ss:$4 sm:$0xff] %v943
      %v988 = vld.sshfl [vmem:[#allocation1] sm:$0xff pattern:$0x73625140]
      %v989 = vld.sshfl [vmem:[#allocation1 + $0x8] sm:$0xff pattern:$0x73625140]
      %v1024 = vunpack.c.l.b16 %v945
      %v1025 = vunpack.c.l.b16 %v946
      %v1026 = vunpack.c.l.b16 %v947
      %v1027 = vunpack.c.l.b16 %v948
      %v1028 = vunpack.c.l.b16 %v949
      %v1029 = vunpack.c.l.b16 %v950
      %v1030 = vunpack.c.l.b16 %v951
      %v1031 = vunpack.c.l.b16 %v952
      %v1032 = vunpack.c.l.b16 %v953
      %v1033 = vunpack.c.l.b16 %v954
      %v1034 = vunpack.c.l.b16 %v955
      %v1035 = vunpack.c.l.b16 %v956
      %v1036 = vunpack.c.l.b16 %v957
      %v1037 = vunpack.c.l.b16 %v958
      %v1038 = vunpack.c.l.b16 %v959
      %v1039 = vunpack.c.l.b16 %v960
      %v1040 = vunpack.c.l.b16 %v961
      %v1041 = vunpack.c.l.b16 %v962
      %v1042 = vunpack.c.l.b16 %v963
      %v1043 = vunpack.c.l.b16 %v964
      %v1044 = vunpack.c.l.b16 %v965
      %v1045 = vunpack.c.l.b16 %v966
      %v1046 = vunpack.c.l.b16 %v967
      %v1047 = vunpack.c.l.b16 %v968
      %v1048 = vunpack.c.l.b16 %v969
      %v1049 = vunpack.c.l.b16 %v970
      %v1050 = vunpack.c.l.b16 %v971
      %v1051 = vunpack.c.l.b16 %v972
      %v1052 = vunpack.c.l.b16 %v973
      %v1053 = vunpack.c.l.b16 %v974
      %v1054 = vunpack.c.l.b16 %v975
      %v1055 = vunpack.c.l.b16 %v976
      %v1056 = vpack.c.b16 %v1025, %v1024
      %v1057 = vpack.c.b16 %v1027, %v1026
      %v1058 = vpack.c.b16 %v1029, %v1028
      %v1059 = vpack.c.b16 %v1031, %v1030
      %v1060 = vpack.c.b16 %v1033, %v1032
      %v1061 = vpack.c.b16 %v1035, %v1034
      %v1062 = vpack.c.b16 %v1037, %v1036
      %v1063 = vpack.c.b16 %v1039, %v1038
      %v1064 = vpack.c.b16 %v1041, %v1040
      %v1065 = vpack.c.b16 %v1043, %v1042
      %v1066 = vpack.c.b16 %v1045, %v1044
      %v1067 = vpack.c.b16 %v1047, %v1046
      %v1068 = vpack.c.b16 %v1049, %v1048
      %v1069 = vpack.c.b16 %v1051, %v1050
      %v1070 = vpack.c.b16 %v1053, %v1052
      %v1071 = vpack.c.b16 %v1055, %v1054
      %1088 = vmatpush.bf16.msra.mxu0 %v1063
      %1089 = vmatpush.bf16.msra.mxu0 %v1062
      %1090 = vmatpush.bf16.msra.mxu0 %v1061
      %1091 = vmatpush.bf16.msra.mxu0 %v1060
      %1092 = vmatpush.bf16.msra.mxu0 %v1059
      %1093 = vmatpush.bf16.msra.mxu0 %v1058
      %1094 = vmatpush.bf16.msra.mxu0 %v1057
      %1095 = vmatpush.bf16.msra.mxu0 %v1056
      %1096 = vmatmul.bf16.gmra.mxu0 %v988
      %v1097 = vpop.f32.mrf.mxu0
      %v1098 = vadd.f32 0.0, %v1097
      %v1099 = vpop.f32.mrf.mxu0
      %v1100 = vadd.f32 0.0, %v1099
      %1101 = vdwg.mxu0
      %1102 = vmatpush.bf16.msra.mxu0 %v1071
      %1103 = vmatpush.bf16.msra.mxu0 %v1070
      %1104 = vmatpush.bf16.msra.mxu0 %v1069
      %1105 = vmatpush.bf16.msra.mxu0 %v1068
      %1106 = vmatpush.bf16.msra.mxu0 %v1067
      %1107 = vmatpush.bf16.msra.mxu0 %v1066
      %1108 = vmatpush.bf16.msra.mxu0 %v1065
      %1109 = vmatpush.bf16.msra.mxu0 %v1064
      %1110 = vmatmul.bf16.gmra.mxu0 %v989
      %v1111 = vpop.f32.mrf.mxu0
      %v1112 = vadd.f32 %v1098, %v1111
      %v1113 = vpop.f32.mrf.mxu0
      %v1114 = vadd.f32 %v1100, %v1113
      %1115 = vdwg.mxu0
      %v1116 = vadd.f32 %v854, %v1112
      %v1117 = vadd.f32 %v855, %v1114
      %v1118 = vld [vmem:[%s2] sm:$0x1]
      %v1120 = vperm.slane %v1118, 0
      %v1122 = vadd.f32 %v1116, %v1120
      %v1123 = vadd.f32 %v1117, %v1120
      %vm1124 = vcmp.ge.f32.partialorder %v1122, 0.0
      %vm1125 = vcmp.ge.f32.partialorder %v1123, 0.0
      %v1126 = vmul.f32 %v1122, 0.2
      %v1127 = vmul.f32 %v1123, 0.2
      %v1128 = vsel %vm1124, %v1122, %v1126
      %v1129 = vsel %vm1125, %v1123, %v1127
      %v1132 = vrot.slane %v1128, 4
      %v1133 = vrot.slane %v1129, 4
      %v1136 = vpack.c.bf16 %v1128, %v1128
      %v1137 = vpack.c.bf16 %v1132, %v1132
      %v1138 = vpack.c.bf16 %v1129, %v1129
      %v1139 = vpack.c.bf16 %v1133, %v1133
      %1140 = vst [vmem:[%s192] sm:$0x3] %v1136
      %1141 = vst [vmem:[%s192 + $0x2] sm:$0x3] %v1137
      %1142 = vst [vmem:[%s192 + $0x4] sm:$0x3] %v1138
      %1143 = vst [vmem:[%s192 + $0x6] sm:$0x3] %v1139
      %s1144 = smul.u32 4, %s19
      %p1145 = scmp.lt.s32.totalorder %s18, 1
      %s1146 = scalar_select %p1145, %s18, 1
      %p1147 = scmp.lt.s32.totalorder %s1144, 3
      %s1148 = scalar_select %p1147, %s1144, 3
      %s1149 = smul.addr %s1146, 4
      %s1150 = sadd.s32 %s1148, %s1149
      %s1151 = smul.addr %s1150, 2
      %s1152 = scalar_lea.vmem %s3, %s1151
      // Predicated region
      $region33: #{discriminator_forward.4} parent=31 // pred_check
        %p1153 = pneg %p114
      $region34: #{discriminator_forward.4} parent=31 // pred_check_branch
        %1155 = sbr.rel (%p1153) target = $region36
      $region35: #{discriminator_forward.4} parent=31 // pred_region
        %s1156 = smul.u32 4, %s19
      $region36: #{discriminator_forward.4} parent=31 // pred_fallthru
        _
    $region32: #{discriminator_forward.4} parent=5 // pred_fallthru
      _
    %p1157 = scmp.le.s32.totalorder 2, %s9
    // Predicated region
    $region37: #{discriminator_forward.4} parent=5 // pred_check
      %p1158 = pneg %p1157
    $region38: #{discriminator_forward.4} parent=5 // pred_check_branch
      %1160 = sbr.rel (%p1158) target = $region40
    $region39: #{discriminator_forward.4} parent=5 // pred_region
      %s1161 = ssub.s32 %s9, 2
      // Predicated region
      $region41: #{discriminator_forward.4} parent=39 // pred_check
        %p1162 = pneg %p120
      $region42: #{discriminator_forward.4} parent=39 // pred_check_branch
        %1164 = sbr.rel (%p1162) target = $region44
      $region43: #{discriminator_forward.4} parent=39 // pred_region
        %s1165 = smul.u32 4, %s21
        %p1166 = scmp.lt.s32.totalorder %s20, 1
        %s1167 = scalar_select %p1166, %s20, 1
        %p1168 = scmp.lt.s32.totalorder %s1165, 3
        %s1169 = scalar_select %p1168, %s1165, 3
        %s1170 = smul.addr %s1167, 4
        %s1171 = sadd.s32 %s1169, %s1170
        %s1172 = smul.addr %s1171, 2
        %s1173 = scalar_lea.vmem %s3, %s1172
      $region44: #{discriminator_forward.4} parent=39 // pred_fallthru
        _
    $region40: #{discriminator_forward.4} parent=5 // pred_fallthru
      _
  $region6: #{discriminator_forward.4} parent=0 // loop_footer
    %s13 = sadd.s32 1, %s9
  $region7: #{discriminator_forward.4} parent=0 // loop_footer_branch
    %8 = sbr.rel target = $region3
  $region8: #{discriminator_forward.4} parent=0 // loop_exit
    _

// kernel: discriminator_forward.5
$region0: #{discriminator_forward.5}
  #allocation0 [shape = 'u32[]', space=smem, size = 0x4, offset = 0x4, fixed_abs, tag = 'smem constant byte address 0x4 - core index']
  #allocation1 [shape = 'u32[72,128]{1,0:T(1,128)}', space=vmem, size = 0x9000, scoped, tag = 'internal scratch']
  #allocation2 [shape = 'f32[1,1]{1,0:T(1,128)S(1)}', space=vmem, size = 0x200, scoped, tag = 'scoped memory for discriminator_forward.5']
  %s0 = inlined_call_operand.vmem [shape: bf16[2,6,6,128], index: 0, kind: input, shape index: {}]
  %s1 = inlined_call_operand.vmem [shape: f32[16,128], index: 1, kind: input, shape index: {}]
  %s2 = inlined_call_operand.<no memory space> [shape: f32[1,1], index: 2, kind: input, shape index: {}]
  %s3 = inlined_call_operand.vmem [shape: f32[2,3,3], index: 3, kind: output, shape index: {}]
  %s4 = sld [smem:[#allocation0]]
  $region45: #{discriminator_forward.5} parent=0
    _
  %s6 = ssub.s32 1, %s4
  %s7 = scalar_select 0, %s6, %s4
  %v8 = vstv %s2
  %9 = vst [vmem:[#allocation2] sm:$0x1] %v8
  loop: start=0, step=1, limit=4
  $region2: #{discriminator_forward.5} parent=0 // loop_pre_header
    _
  $region3: #{discriminator_forward.5} parent=0 // loop_header
    %s11 = sphi 0, %s15
    %p12 = scmp.ge.s32.totalorder %s11, 4
    %s21 = sphi 0, %s23
    %s24 = sphi 0, %s21
    %s25 = sphi 0, %s24
    %s41 = sphi 0, %s25
    %s45 = sphi 0, %s45
    %s47 = sphi 0, %s45
    %s48 = sphi 0, %s47
    %s62 = sphi 0, %s48
    %s66 = sphi 0, %s66
    %s68 = sphi 0, %s66
    %s69 = sphi 0, %s68
    %s83 = sphi 0, %s69
    %s89 = sphi 0, %s91
    %s92 = sphi 0, %s89
    %s93 = sphi 0, %s92
    %s109 = sphi 0, %s93
  $region4: #{discriminator_forward.5} parent=0 // loop_header_branch
    %14 = sbr.rel (%p12) target = $region8
  $region5: #{discriminator_forward.5} parent=0 // loop_body
    %s16 = ssub.s32 %s11, 1
    %s17 = ssub.s32 %s11, 2
    %s18 = sadd.s32 %s11, 1
    %s19 = ssub.s32 %s11, %s18
    %p20 = scmp.eq.s32.totalorder %s19, 0
    %s22 = sadd.s32 %s21, 1
    %s23 = scalar_select %p20, %s21, %s22
    %p26 = pneg %p20
    %p27 = scmp.eq.s32.totalorder %s11, 1
    %p28 = por %p26, %p27
    %p29 = scmp.ne.s32.totalorder %s21, %s24
    %p30 = scmp.eq.s32.totalorder %s11, 0
    %p31 = por %p29, %p30
    %p32 = scmp.ne.s32.totalorder %s21, %s24
    %p33 = scmp.eq.s32.totalorder %s16, 1
    %p34 = por %p32, %p33
    %p35 = scmp.ne.s32.totalorder %s24, %s25
    %p36 = scmp.eq.s32.totalorder %s16, 0
    %p37 = por %p35, %p36
    %p38 = scmp.ne.s32.totalorder %s24, %s25
    %p39 = scmp.eq.s32.totalorder %s17, 1
    %p40 = por %p38, %p39
    %p42 = scmp.ne.s32.totalorder %s25, %s41
    %p43 = scmp.eq.s32.totalorder %s17, 0
    %p44 = por %p42, %p43
    %s46 = sadd.s32 %s45, 1
    %p49 = scmp.eq.s32.totalorder %s11, 1
    %p50 = scmp.ne.s32.totalorder %s45, %s47
    %p51 = scmp.eq.s32.totalorder %s11, 0
    %p52 = por %p50, %p51
    %p53 = scmp.ne.s32.totalorder %s45, %s47
    %p54 = scmp.eq.s32.totalorder %s16, 1
    %p55 = por %p53, %p54
    %p56 = scmp.ne.s32.totalorder %s47, %s48
    %p57 = scmp.eq.s32.totalorder %s16, 0
    %p58 = por %p56, %p57
    %p59 = scmp.ne.s32.totalorder %s47, %s48
    %p60 = scmp.eq.s32.totalorder %s17, 1
    %p61 = por %p59, %p60
    %p63 = scmp.ne.s32.totalorder %s48, %s62
    %p64 = scmp.eq.s32.totalorder %s17, 0
    %p65 = por %p63, %p64
    %s67 = sadd.s32 %s66, 1
    %p70 = scmp.eq.s32.totalorder %s11, 1
    %p71 = scmp.ne.s32.totalorder %s66, %s68
    %p72 = scmp.eq.s32.totalorder %s11, 0
    %p73 = por %p71, %p72
    %p74 = scmp.ne.s32.totalorder %s66, %s68
    %p75 = scmp.eq.s32.totalorder %s16, 1
    %p76 = por %p74, %p75
    %p77 = scmp.ne.s32.totalorder %s68, %s69
    %p78 = scmp.eq.s32.totalorder %s16, 0
    %p79 = por %p77, %p78
    %p80 = scmp.ne.s32.totalorder %s68, %s69
    %p81 = scmp.eq.s32.totalorder %s17, 1
    %p82 = por %p80, %p81
    %p84 = scmp.ne.s32.totalorder %s69, %s83
    %p85 = scmp.eq.s32.totalorder %s17, 0
    %p86 = por %p84, %p85
    %s87 = ssub.s32 %s11, %s18
    %p88 = scmp.eq.s32.totalorder %s87, 0
    %s90 = sadd.s32 %s89, 1
    %s91 = scalar_select %p88, %s89, %s90
    %p94 = pneg %p88
    %p95 = scmp.eq.s32.totalorder %s11, 1
    %p96 = por %p94, %p95
    %p97 = scmp.ne.s32.totalorder %s89, %s92
    %p98 = scmp.eq.s32.totalorder %s11, 0
    %p99 = por %p97, %p98
    %p100 = scmp.ne.s32.totalorder %s89, %s92
    %p101 = scmp.eq.s32.totalorder %s16, 1
    %p102 = por %p100, %p101
    %p103 = scmp.ne.s32.totalorder %s92, %s93
    %p104 = scmp.eq.s32.totalorder %s16, 0
    %p105 = por %p103, %p104
    %p106 = scmp.ne.s32.totalorder %s92, %s93
    %p107 = scmp.eq.s32.totalorder %s17, 1
    %p108 = por %p106, %p107
    %p110 = scmp.ne.s32.totalorder %s93, %s109
    %p111 = scmp.eq.s32.totalorder %s17, 0
    %p112 = por %p110, %p111
    %p113 = scmp.le.s32.totalorder 1, %s11
    %p114 = scmp.lt.s32.totalorder %s11, 3
    %p115 = pnand %p113, %p114
    %p116 = pneg %p115
    // Predicated region
    $region9: #{discriminator_forward.5} parent=5 // pred_check
      _
    $region10: #{discriminator_forward.5} parent=5 // pred_check_branch
      %118 = sbr.rel (%p115) target = $region12
    $region11: #{discriminator_forward.5} parent=5 // pred_region
      %s119 = ssub.s32 %s11, 1
      // Predicated region
      $region13: #{discriminator_forward.5} parent=11 // pred_check
        %p120 = pneg %p58
      $region14: #{discriminator_forward.5} parent=11 // pred_check_branch
        %122 = sbr.rel (%p120) target = $region16
      $region15: #{discriminator_forward.5} parent=11 // pred_region
        _
      $region16: #{discriminator_forward.5} parent=11 // pred_fallthru
        _
      // Predicated region
      $region17: #{discriminator_forward.5} parent=11 // pred_check
        %p123 = pneg %p79
      $region18: #{discriminator_forward.5} parent=11 // pred_check_branch
        %125 = sbr.rel (%p123) target = $region20
      $region19: #{discriminator_forward.5} parent=11 // pred_region
        _
      $region20: #{discriminator_forward.5} parent=11 // pred_fallthru
        _
    $region12: #{discriminator_forward.5} parent=5 // pred_fallthru
      _
    %p126 = scmp.lt.s32.totalorder %s11, 2
    // Predicated region
    $region21: #{discriminator_forward.5} parent=5 // pred_check
      %p127 = pneg %p126
    $region22: #{discriminator_forward.5} parent=5 // pred_check_branch
      %129 = sbr.rel (%p127) target = $region24
    $region23: #{discriminator_forward.5} parent=5 // pred_region
      // Predicated region
      $region25: #{discriminator_forward.5} parent=23 // pred_check
        %p130 = pneg %p31
      $region26: #{discriminator_forward.5} parent=23 // pred_check_branch
        %132 = sbr.rel (%p130) target = $region28
      $region27: #{discriminator_forward.5} parent=23 // pred_region
        %p133 = scmp.lt.s32.totalorder %s11, 1
        %s134 = scalar_select %p133, %s11, 1
        %s135 = smul.addr %s134, 6
        %s136 = smul.addr %s135, 4
        %s137 = scalar_lea.vmem %s0, %s136
      $region28: #{discriminator_forward.5} parent=23 // pred_fallthru
        _
    $region24: #{discriminator_forward.5} parent=5 // pred_fallthru
      _
    %p138 = scmp.le.s32.totalorder 1, %s11
    %p139 = scmp.lt.s32.totalorder %s11, 3
    %p140 = pnand %p138, %p139
    %p141 = pneg %p140
    // Predicated region
    $region29: #{discriminator_forward.5} parent=5 // pred_check
      _
    $region30: #{discriminator_forward.5} parent=5 // pred_check_branch
      %143 = sbr.rel (%p140) target = $region32
    $region31: #{discriminator_forward.5} parent=5 // pred_region
      %s144 = ssub.s32 %s11, 1
      %p145 = scmp.lt.s32.totalorder %s16, 1
      %s146 = scalar_select %p145, %s16, 1
      %s147 = smul.addr %s146, 6
      %s148 = smul.addr %s147, 4
      %s149 = scalar_lea.vmem %s0, %s148
      %p150 = pneg %p37
      %p151 = pneg %p34
      %p152 = pneg %p58
      %p153 = pneg %p55
      %p154 = pneg %p79
      %p155 = pneg %p76
      %p156 = pneg %p105
      %p157 = pneg %p102
      %p158 = scmp.lt.s32.totalorder %s16, 1
      %s159 = scalar_select %p158, %s16, 1
      %s160 = smul.addr %s159, 4
      %s161 = scalar_lea.vmem %s3, %s160
      %p162 = scmp.lt.s32.totalorder %s16, 1
      %s163 = scalar_select %p162, %s16, 1
      %s164 = smul.addr %s163, 6
      %s165 = smul.addr %s164, 4
      %s166 = scalar_lea.vmem %s0, %s165
      %p167 = scmp.lt.s32.totalorder %s16, 1
      %s168 = scalar_select %p167, %s16, 1
      %s169 = smul.addr %s168, 4
      %s170 = scalar_lea.vmem %s3, %s169
      %v171 = vld [vmem:[%s166] sm:$0x3]
      %v172 = vld [vmem:[%s166 + $0x4] sm:$0x3]
      %v173 = vld [vmem:[%s166 + $0x8] sm:$0x3]
      %v174 = vunpack.c.l.bf16 %v171
      %v175 = vunpack.c.l.bf16 %v172
      %v176 = vunpack.c.l.bf16 %v173
      %v177 = vld [vmem:[%s1] sm:$0x1]
      %v178 = vperm.slane %v177, 0
      %v179 = vmul.f32 %v174, %v178
      %v180 = vmul.f32 %v175, %v178
      %v181 = vmul.f32 %v176, %v178
      %vm182 = vcmask 1042432
      %v183 = vsel %vm182, %v179, 0.0
      %184 = vadd.xlane.f32.xlu0 %v183
      %v185 = vpop.xlane.xlu0 %184
      %v186 = vsel %vm182, %v180, 0.0
      %187 = vadd.xlane.f32.xlu0 %v186
      %v188 = vpop.xlane.xlu0 %187
      %v189 = vsel %vm182, %v181, 0.0
      %190 = vadd.xlane.f32.xlu0 %v189
      %v191 = vpop.xlane.xlu0 %190
      %v192 = vadd.f32 %v185, 0.0
      %v193 = vadd.f32 %v188, 0.0
      %v194 = vadd.f32 %v191, 0.0
      %v195 = vld [vmem:[%s1 + $0x1] sm:$0x1]
      %v196 = vperm.slane %v195, 0
      %v197 = vmul.f32 %v174, %v196
      %v198 = vmul.f32 %v175, %v196
      %v199 = vmul.f32 %v176, %v196
      %vm200 = vcmask 1043457
      %v201 = vsel %vm200, %v197, 0.0
      %202 = vadd.xlane.f32.xlu0 %v201
      %v203 = vpop.xlane.xlu0 %202
      %v204 = vsel %vm200, %v198, 0.0
      %205 = vadd.xlane.f32.xlu0 %v204
      %v206 = vpop.xlane.xlu0 %205
      %v207 = vsel %vm200, %v199, 0.0
      %208 = vadd.xlane.f32.xlu0 %v207
      %v209 = vpop.xlane.xlu0 %208
      %v213 = vrot.slane %v203, 1
      %v214 = vrot.slane %v206, 1
      %v215 = vrot.slane %v209, 1
      %v219 = vadd.f32 %v192, %v213
      %v220 = vadd.f32 %v193, %v214
      %v221 = vadd.f32 %v194, %v215
      %v222 = vld [vmem:[%s166] sm:$0x6]
      %v223 = vld [vmem:[%s166 + $0x4] sm:$0x6]
      %v224 = vld [vmem:[%s166 + $0x8] sm:$0x6]
      %v225 = vunpack.c.l.bf16 %v222
      %v226 = vunpack.c.l.bf16 %v223
      %v227 = vunpack.c.l.bf16 %v224
      %v228 = vld [vmem:[%s1 + $0x2] sm:$0x1]
      %v229 = vperm.slane %v228, 0
      %v230 = vmul.f32 %v225, %v229
      %v231 = vmul.f32 %v226, %v229
      %v232 = vmul.f32 %v227, %v229
      %vm233 = vcmask 1044482
      %v234 = vsel %vm233, %v230, 0.0
      %235 = vadd.xlane.f32.xlu0 %v234
      %v236 = vpop.xlane.xlu0 %235
      %v237 = vsel %vm233, %v231, 0.0
      %238 = vadd.xlane.f32.xlu0 %v237
      %v239 = vpop.xlane.xlu0 %238
      %v240 = vsel %vm233, %v232, 0.0
      %241 = vadd.xlane.f32.xlu0 %v240
      %v242 = vpop.xlane.xlu0 %241
      %v246 = vrot.slane %v236, 2
      %v247 = vrot.slane %v239, 2
      %v248 = vrot.slane %v242, 2
      %v252 = vadd.f32 %v219, %v246
      %v253 = vadd.f32 %v220, %v247
      %v254 = vadd.f32 %v221, %v248
      %v255 = vld [vmem:[%s1 + $0x3] sm:$0x1]
      %v256 = vperm.slane %v255, 0
      %v257 = vmul.f32 %v225, %v256
      %v258 = vmul.f32 %v226, %v256
      %v259 = vmul.f32 %v227, %v256
      %vm260 = vcmask 1045507
      %v261 = vsel %vm260, %v257, 0.0
      %262 = vadd.xlane.f32.xlu0 %v261
      %v263 = vpop.xlane.xlu0 %262
      %v264 = vsel %vm260, %v258, 0.0
      %265 = vadd.xlane.f32.xlu0 %v264
      %v266 = vpop.xlane.xlu0 %265
      %v267 = vsel %vm260, %v259, 0.0
      %268 = vadd.xlane.f32.xlu0 %v267
      %v269 = vpop.xlane.xlu0 %268
      %v273 = vrot.slane %v263, 3
      %v274 = vrot.slane %v266, 3
      %v275 = vrot.slane %v269, 3
      %v279 = vadd.f32 %v252, %v273
      %v280 = vadd.f32 %v253, %v274
      %v281 = vadd.f32 %v254, %v275
      %s282 = scalar_lea.vmem %s166, 4
      %v283 = vld [vmem:[%s282] sm:$0x3]
      %v284 = vld [vmem:[%s282 + $0x4] sm:$0x3]
      %v285 = vld [vmem:[%s282 + $0x8] sm:$0x3]
      %v286 = vunpack.c.l.bf16 %v283
      %v287 = vunpack.c.l.bf16 %v284
      %v288 = vunpack.c.l.bf16 %v285
      %v289 = vld [vmem:[%s1 + $0x4] sm:$0x1]
      %v290 = vperm.slane %v289, 0
      %v291 = vmul.f32 %v286, %v290
      %v292 = vmul.f32 %v287, %v290
      %v293 = vmul.f32 %v288, %v290
      %v294 = vsel %vm182, %v291, 0.0
      %295 = vadd.xlane.f32.xlu0 %v294
      %v296 = vpop.xlane.xlu0 %295
      %v297 = vsel %vm182, %v292, 0.0
      %298 = vadd.xlane.f32.xlu0 %v297
      %v299 = vpop.xlane.xlu0 %298
      %v300 = vsel %vm182, %v293, 0.0
      %301 = vadd.xlane.f32.xlu0 %v300
      %v302 = vpop.xlane.xlu0 %301
      %v303 = vadd.f32 %v279, %v296
      %v304 = vadd.f32 %v280, %v299
      %v305 = vadd.f32 %v281, %v302
      %v306 = vld [vmem:[%s1 + $0x5] sm:$0x1]
      %v307 = vperm.slane %v306, 0
      %v308 = vmul.f32 %v286, %v307
      %v309 = vmul.f32 %v287, %v307
      %v310 = vmul.f32 %v288, %v307
      %v311 = vsel %vm200, %v308, 0.0
      %312 = vadd.xlane.f32.xlu0 %v311
      %v313 = vpop.xlane.xlu0 %312
      %v314 = vsel %vm200, %v309, 0.0
      %315 = vadd.xlane.f32.xlu0 %v314
      %v316 = vpop.xlane.xlu0 %315
      %v317 = vsel %vm200, %v310, 0.0
      %318 = vadd.xlane.f32.xlu0 %v317
      %v319 = vpop.xlane.xlu0 %318
      %v323 = vrot.slane %v313, 1
      %v324 = vrot.slane %v316, 1
      %v325 = vrot.slane %v319, 1
      %v329 = vadd.f32 %v303, %v323
      %v330 = vadd.f32 %v304, %v324
      %v331 = vadd.f32 %v305, %v325
      %v332 = vld [vmem:[%s282] sm:$0x6]
      %v333 = vld [vmem:[%s282 + $0x4] sm:$0x6]
      %v334 = vld [vmem:[%s282 + $0x8] sm:$0x6]
      %v335 = vunpack.c.l.bf16 %v332
      %v336 = vunpack.c.l.bf16 %v333
      %v337 = vunpack.c.l.bf16 %v334
      %v338 = vld [vmem:[%s1 + $0x6] sm:$0x1]
      %v339 = vperm.slane %v338, 0
      %v340 = vmul.f32 %v335, %v339
      %v341 = vmul.f32 %v336, %v339
      %v342 = vmul.f32 %v337, %v339
      %v343 = vsel %vm233, %v340, 0.0
      %344 = vadd.xlane.f32.xlu0 %v343
      %v345 = vpop.xlane.xlu0 %344
      %v346 = vsel %vm233, %v341, 0.0
      %347 = vadd.xlane.f32.xlu0 %v346
      %v348 = vpop.xlane.xlu0 %347
      %v349 = vsel %vm233, %v342, 0.0
      %350 = vadd.xlane.f32.xlu0 %v349
      %v351 = vpop.xlane.xlu0 %350
      %v355 = vrot.slane %v345, 2
      %v356 = vrot.slane %v348, 2
      %v357 = vrot.slane %v351, 2
      %v361 = vadd.f32 %v329, %v355
      %v362 = vadd.f32 %v330, %v356
      %v363 = vadd.f32 %v331, %v357
      %v364 = vld [vmem:[%s1 + $0x7] sm:$0x1]
      %v365 = vperm.slane %v364, 0
      %v366 = vmul.f32 %v335, %v365
      %v367 = vmul.f32 %v336, %v365
      %v368 = vmul.f32 %v337, %v365
      %v369 = vsel %vm260, %v366, 0.0
      %370 = vadd.xlane.f32.xlu0 %v369
      %v371 = vpop.xlane.xlu0 %370
      %v372 = vsel %vm260, %v367, 0.0
      %373 = vadd.xlane.f32.xlu0 %v372
      %v374 = vpop.xlane.xlu0 %373
      %v375 = vsel %vm260, %v368, 0.0
      %376 = vadd.xlane.f32.xlu0 %v375
      %v377 = vpop.xlane.xlu0 %376
      %v381 = vrot.slane %v371, 3
      %v382 = vrot.slane %v374, 3
      %v383 = vrot.slane %v377, 3
      %v387 = vadd.f32 %v361, %v381
      %v388 = vadd.f32 %v362, %v382
      %v389 = vadd.f32 %v363, %v383
      %s390 = scalar_lea.vmem %s166, 8
      %v391 = vld [vmem:[%s390] sm:$0x3]
      %v392 = vld [vmem:[%s390 + $0x4] sm:$0x3]
      %v393 = vld [vmem:[%s390 + $0x8] sm:$0x3]
      %v394 = vunpack.c.l.bf16 %v391
      %v395 = vunpack.c.l.bf16 %v392
      %v396 = vunpack.c.l.bf16 %v393
      %v397 = vld [vmem:[%s1 + $0x8] sm:$0x1]
      %v398 = vperm.slane %v397, 0
      %v399 = vmul.f32 %v394, %v398
      %v400 = vmul.f32 %v395, %v398
      %v401 = vmul.f32 %v396, %v398
      %v402 = vsel %vm182, %v399, 0.0
      %403 = vadd.xlane.f32.xlu0 %v402
      %v404 = vpop.xlane.xlu0 %403
      %v405 = vsel %vm182, %v400, 0.0
      %406 = vadd.xlane.f32.xlu0 %v405
      %v407 = vpop.xlane.xlu0 %406
      %v408 = vsel %vm182, %v401, 0.0
      %409 = vadd.xlane.f32.xlu0 %v408
      %v410 = vpop.xlane.xlu0 %409
      %v411 = vadd.f32 %v387, %v404
      %v412 = vadd.f32 %v388, %v407
      %v413 = vadd.f32 %v389, %v410
      %v414 = vld [vmem:[%s1 + $0x9] sm:$0x1]
      %v415 = vperm.slane %v414, 0
      %v416 = vmul.f32 %v394, %v415
      %v417 = vmul.f32 %v395, %v415
      %v418 = vmul.f32 %v396, %v415
      %v419 = vsel %vm200, %v416, 0.0
      %420 = vadd.xlane.f32.xlu0 %v419
      %v421 = vpop.xlane.xlu0 %420
      %v422 = vsel %vm200, %v417, 0.0
      %423 = vadd.xlane.f32.xlu0 %v422
      %v424 = vpop.xlane.xlu0 %423
      %v425 = vsel %vm200, %v418, 0.0
      %426 = vadd.xlane.f32.xlu0 %v425
      %v427 = vpop.xlane.xlu0 %426
      %v431 = vrot.slane %v421, 1
      %v432 = vrot.slane %v424, 1
      %v433 = vrot.slane %v427, 1
      %v437 = vadd.f32 %v411, %v431
      %v438 = vadd.f32 %v412, %v432
      %v439 = vadd.f32 %v413, %v433
      %v440 = vld [vmem:[%s390] sm:$0x6]
      %v441 = vld [vmem:[%s390 + $0x4] sm:$0x6]
      %v442 = vld [vmem:[%s390 + $0x8] sm:$0x6]
      %v443 = vunpack.c.l.bf16 %v440
      %v444 = vunpack.c.l.bf16 %v441
      %v445 = vunpack.c.l.bf16 %v442
      %v446 = vld [vmem:[%s1 + $0xa] sm:$0x1]
      %v447 = vperm.slane %v446, 0
      %v448 = vmul.f32 %v443, %v447
      %v449 = vmul.f32 %v444, %v447
      %v450 = vmul.f32 %v445, %v447
      %v451 = vsel %vm233, %v448, 0.0
      %452 = vadd.xlane.f32.xlu0 %v451
      %v453 = vpop.xlane.xlu0 %452
      %v454 = vsel %vm233, %v449, 0.0
      %455 = vadd.xlane.f32.xlu0 %v454
      %v456 = vpop.xlane.xlu0 %455
      %v457 = vsel %vm233, %v450, 0.0
      %458 = vadd.xlane.f32.xlu0 %v457
      %v459 = vpop.xlane.xlu0 %458
      %v463 = vrot.slane %v453, 2
      %v464 = vrot.slane %v456, 2
      %v465 = vrot.slane %v459, 2
      %v469 = vadd.f32 %v437, %v463
      %v470 = vadd.f32 %v438, %v464
      %v471 = vadd.f32 %v439, %v465
      %v472 = vld [vmem:[%s1 + $0xb] sm:$0x1]
      %v473 = vperm.slane %v472, 0
      %v474 = vmul.f32 %v443, %v473
      %v475 = vmul.f32 %v444, %v473
      %v476 = vmul.f32 %v445, %v473
      %v477 = vsel %vm260, %v474, 0.0
      %478 = vadd.xlane.f32.xlu0 %v477
      %v479 = vpop.xlane.xlu0 %478
      %v480 = vsel %vm260, %v475, 0.0
      %481 = vadd.xlane.f32.xlu0 %v480
      %v482 = vpop.xlane.xlu0 %481
      %v483 = vsel %vm260, %v476, 0.0
      %484 = vadd.xlane.f32.xlu0 %v483
      %v485 = vpop.xlane.xlu0 %484
      %v489 = vrot.slane %v479, 3
      %v490 = vrot.slane %v482, 3
      %v491 = vrot.slane %v485, 3
      %v495 = vadd.f32 %v469, %v489
      %v496 = vadd.f32 %v470, %v490
      %v497 = vadd.f32 %v471, %v491
      %s498 = scalar_lea.vmem %s166, 12
      %v499 = vld [vmem:[%s498] sm:$0x3]
      %v500 = vld [vmem:[%s498 + $0x4] sm:$0x3]
      %v501 = vld [vmem:[%s498 + $0x8] sm:$0x3]
      %v502 = vunpack.c.l.bf16 %v499
      %v503 = vunpack.c.l.bf16 %v500
      %v504 = vunpack.c.l.bf16 %v501
      %v505 = vld [vmem:[%s1 + $0xc] sm:$0x1]
      %v506 = vperm.slane %v505, 0
      %v507 = vmul.f32 %v502, %v506
      %v508 = vmul.f32 %v503, %v506
      %v509 = vmul.f32 %v504, %v506
      %v510 = vsel %vm182, %v507, 0.0
      %511 = vadd.xlane.f32.xlu0 %v510
      %v512 = vpop.xlane.xlu0 %511
      %v513 = vsel %vm182, %v508, 0.0
      %514 = vadd.xlane.f32.xlu0 %v513
      %v515 = vpop.xlane.xlu0 %514
      %v516 = vsel %vm182, %v509, 0.0
      %517 = vadd.xlane.f32.xlu0 %v516
      %v518 = vpop.xlane.xlu0 %517
      %v519 = vadd.f32 %v495, %v512
      %v520 = vadd.f32 %v496, %v515
      %v521 = vadd.f32 %v497, %v518
      %v522 = vld [vmem:[%s1 + $0xd] sm:$0x1]
      %v523 = vperm.slane %v522, 0
      %v524 = vmul.f32 %v502, %v523
      %v525 = vmul.f32 %v503, %v523
      %v526 = vmul.f32 %v504, %v523
      %v527 = vsel %vm200, %v524, 0.0
      %528 = vadd.xlane.f32.xlu0 %v527
      %v529 = vpop.xlane.xlu0 %528
      %v530 = vsel %vm200, %v525, 0.0
      %531 = vadd.xlane.f32.xlu0 %v530
      %v532 = vpop.xlane.xlu0 %531
      %v533 = vsel %vm200, %v526, 0.0
      %534 = vadd.xlane.f32.xlu0 %v533
      %v535 = vpop.xlane.xlu0 %534
      %v539 = vrot.slane %v529, 1
      %v540 = vrot.slane %v532, 1
      %v541 = vrot.slane %v535, 1
      %v545 = vadd.f32 %v519, %v539
      %v546 = vadd.f32 %v520, %v540
      %v547 = vadd.f32 %v521, %v541
      %v548 = vld [vmem:[%s498] sm:$0x6]
      %v549 = vld [vmem:[%s498 + $0x4] sm:$0x6]
      %v550 = vld [vmem:[%s498 + $0x8] sm:$0x6]
      %v551 = vunpack.c.l.bf16 %v548
      %v552 = vunpack.c.l.bf16 %v549
      %v553 = vunpack.c.l.bf16 %v550
      %v554 = vld [vmem:[%s1 + $0xe] sm:$0x1]
      %v555 = vperm.slane %v554, 0
      %v556 = vmul.f32 %v551, %v555
      %v557 = vmul.f32 %v552, %v555
      %v558 = vmul.f32 %v553, %v555
      %v559 = vsel %vm233, %v556, 0.0
      %560 = vadd.xlane.f32.xlu0 %v559
      %v561 = vpop.xlane.xlu0 %560
      %v562 = vsel %vm233, %v557, 0.0
      %563 = vadd.xlane.f32.xlu0 %v562
      %v564 = vpop.xlane.xlu0 %563
      %v565 = vsel %vm233, %v558, 0.0
      %566 = vadd.xlane.f32.xlu0 %v565
      %v567 = vpop.xlane.xlu0 %566
      %v571 = vrot.slane %v561, 2
      %v572 = vrot.slane %v564, 2
      %v573 = vrot.slane %v567, 2
      %v577 = vadd.f32 %v545, %v571
      %v578 = vadd.f32 %v546, %v572
      %v579 = vadd.f32 %v547, %v573
      %v580 = vld [vmem:[%s1 + $0xf] sm:$0x1]
      %v581 = vperm.slane %v580, 0
      %v582 = vmul.f32 %v551, %v581
      %v583 = vmul.f32 %v552, %v581
      %v584 = vmul.f32 %v553, %v581
      %v585 = vsel %vm260, %v582, 0.0
      %586 = vadd.xlane.f32.xlu0 %v585
      %v587 = vpop.xlane.xlu0 %586
      %v588 = vsel %vm260, %v583, 0.0
      %589 = vadd.xlane.f32.xlu0 %v588
      %v590 = vpop.xlane.xlu0 %589
      %v591 = vsel %vm260, %v584, 0.0
      %592 = vadd.xlane.f32.xlu0 %v591
      %v593 = vpop.xlane.xlu0 %592
      %v597 = vrot.slane %v587, 3
      %v598 = vrot.slane %v590, 3
      %v599 = vrot.slane %v593, 3
      %v603 = vadd.f32 %v577, %v597
      %v604 = vadd.f32 %v578, %v598
      %v605 = vadd.f32 %v579, %v599
      %v606 = vld [vmem:[#allocation2] sm:$0x1]
      %v608 = vperm.slane %v606, 0
      %609 = vset.pattern.permute.xlu0 0
      %610 = vperm.xlu0 %609, %v608
      %v611 = vpop.permute.xlu0 %610
      %v613 = vadd.f32 %v603, %v611
      %v614 = vadd.f32 %v604, %v611
      %v615 = vadd.f32 %v605, %v611
      %v616 = vsub.f32 0.0, %v613
      %v617 = vsub.f32 0.0, %v614
      %v618 = vsub.f32 0.0, %v615
      %v619 = vmul.f32 %v616, 1.442695
      %v620 = vpow.pop %v619
      %v621 = vmul.f32 %v617, 1.442695
      %v622 = vpow.pop %v621
      %v623 = vmul.f32 %v618, 1.442695
      %v624 = vpow.pop %v623
      %v625 = vadd.f32 %v620, 1.0
      %v626 = vadd.f32 %v622, 1.0
      %v627 = vadd.f32 %v624, 1.0
      %v628 = vrcp.pop %v625
      %v629 = vrcp.pop %v626
      %v630 = vrcp.pop %v627
      %634 = vset.pattern.permute.xlu0 0
      %635 = vperm.xlu0 %634, %v628
      %v636 = vpop.permute.xlu0 %635
      %637 = vset.pattern.permute.xlu0 0
      %638 = vperm.xlu0 %637, %v629
      %v639 = vpop.permute.xlu0 %638
      %640 = vset.pattern.permute.xlu0 0
      %641 = vperm.xlu0 %640, %v630
      %v642 = vpop.permute.xlu0 %641
      %v643 = vlaneseq
      %v644 = vand.u32 %v643, 127
      %v645 = vperm.slane %v636, %v644
      %v646 = vperm.slane %v639, %v644
      %v647 = vperm.slane %v642, %v644
      %vm648 = vcmask 1041409
      %v649 = vsel %vm648, %v646, %v645
      %vm650 = vcmask 1042434
      %v651 = vsel %vm650, %v647, %v649
      %vm653 = vcmask 18432
      %654 = vst.msk [vmem:[%s170] sm:$0x7] %vm653, %v651
      %p655 = scmp.lt.s32.totalorder %s16, 1
      %s656 = scalar_select %p655, %s16, 1
      %s657 = smul.addr %s656, 4
      %s658 = scalar_lea.vmem %s3, %s657
      // Predicated region
      $region33: #{discriminator_forward.5} parent=31 // pred_check
        %p659 = pneg %p102
      $region34: #{discriminator_forward.5} parent=31 // pred_check_branch
        %661 = sbr.rel (%p659) target = $region36
      $region35: #{discriminator_forward.5} parent=31 // pred_region
        _
      $region36: #{discriminator_forward.5} parent=31 // pred_fallthru
        _
    $region32: #{discriminator_forward.5} parent=5 // pred_fallthru
      _
    %p662 = scmp.le.s32.totalorder 2, %s11
    // Predicated region
    $region37: #{discriminator_forward.5} parent=5 // pred_check
      %p663 = pneg %p662
    $region38: #{discriminator_forward.5} parent=5 // pred_check_branch
      %665 = sbr.rel (%p663) target = $region40
    $region39: #{discriminator_forward.5} parent=5 // pred_region
      %s666 = ssub.s32 %s11, 2
      // Predicated region
      $region41: #{discriminator_forward.5} parent=39 // pred_check
        %p667 = pneg %p108
      $region42: #{discriminator_forward.5} parent=39 // pred_check_branch
        %669 = sbr.rel (%p667) target = $region44
      $region43: #{discriminator_forward.5} parent=39 // pred_region
        %p670 = scmp.lt.s32.totalorder %s17, 1
        %s671 = scalar_select %p670, %s17, 1
        %s672 = smul.addr %s671, 4
        %s673 = scalar_lea.vmem %s3, %s672
      $region44: #{discriminator_forward.5} parent=39 // pred_fallthru
        _
    $region40: #{discriminator_forward.5} parent=5 // pred_fallthru
      _
  $region6: #{discriminator_forward.5} parent=0 // loop_footer
    %s15 = sadd.s32 1, %s11
  $region7: #{discriminator_forward.5} parent=0 // loop_footer_branch
    %10 = sbr.rel target = $region3
  $region8: #{discriminator_forward.5} parent=0 // loop_exit
    _

</llo_original>
